<compile_context>
chip_gen: v7x
topology: tpu7x:2x2x1
jax: 0.10.0
libtpu: 0.0.40
codegen_flags: <defaults>
</compile_context>

<pallas_src>
import functools

import jax
import jax.numpy as jnp
import numpy as np
from jax import lax
from jax.experimental import pallas as pl
from jax.experimental.pallas import tpu as pltpu


def _largest_divisor_leq(n, cap):
    cap = max(1, min(n, cap))
    for d in range(cap, 0, -1):
        if n % d == 0:
            return d
    return 1


def _vmem_config():
    """Returns (vmem_capacity_or_None, block_budget, vmem_limit, multi_tc)."""
    try:
        info = pltpu.get_tpu_info()
        cap = int(getattr(info, "vmem_capacity_bytes", 0)) or None
    except Exception:
        cap = None
    if cap is None:
        # Unknown generation: conservative defaults, assume 2 TensorCores.
        return None, 16 * 2**20, 32 * 2**20, True
    multi_tc = cap < 100 * 2**20          # v7x: 64 MiB per TC, 2 TCs / chip
    block_budget = int(0.40 * cap)        # double-buffered in + out per step
    vmem_limit = min(int(0.80 * cap), 100 * 2**20)
    return cap, block_budget, vmem_limit, multi_tc


def _block_spec(shape, index_map, pipeline_mode=None):
    if pipeline_mode is None:
        return pl.BlockSpec(shape, index_map)
    return pl.BlockSpec(shape, index_map, pipeline_mode=pipeline_mode)


def _spatial_attention_kernel(w_ref, x_ref, o_ref, pad_ref,
                              *, K, pad, H, W, cc, bb, n_sub, unroll):
    # w_ref  : SMEM (2, K*K) f32                    -- conv weights (out ch squeezed)
    # x_ref  : VMEM (nb, C, HW)                     -- input block (lane dense)
    # o_ref  : VMEM (nb, C, HW)                     -- output block (aliases x in HBM)
    # pad_ref: VMEM (2*bb, HW + 2*(pad*W + pad)) f32-- zero-padded flat avg/max maps
    nb, C, HW = x_ref.shape
    base = pad * W + pad                  # interior start inside the padded scratch
    n_full = C // cc
    cc_tail = C % cc
    inv_c = jnp.float32(1.0 / C)

    # ---- Zero only the padded borders, once per grid step (interiors are
    # fully overwritten for every batch sub-block).
    pad_ref[:, :base] = jnp.zeros((2 * bb, base), jnp.float32)
    pad_ref[:, base + HW:] = jnp.zeros((2 * bb, base), jnp.float32)

    # ---- Flat column index (int32; exact for any H*W).
    lane = lax.broadcasted_iota(jnp.int32, (1, HW), 1)
    if W & (W - 1) == 0:
        col = lane & (W - 1)
    else:
        row = jnp.zeros((1, HW), jnp.int32)
        for r in range(1, H):
            row = row + jnp.where(lane >= r * W, 1, 0).astype(jnp.int32)
        col = lane - W * row

    def channel_stats(b):
        """Channel mean / max of x[b] streamed in cc-sized chunks.

        Each chunk is reduced immediately (XLU sublane reduce), so the loop
        carry is only 2 x (1, HW).
        """
        def body(k, carry):
            s, m = carry
            c0 = pl.multiple_of(k * cc, cc)
            xc = x_ref[b, pl.ds(c0, cc), :].astype(jnp.float32)
            return (s + jnp.sum(xc, axis=0, keepdims=True),
                    jnp.maximum(m, jnp.max(xc, axis=0, keepdims=True)))

        s = jnp.zeros((1, HW), jnp.float32)
        m = jnp.full((1, HW), -jnp.inf, jnp.float32)
        if n_full > 0:
            s, m = lax.fori_loop(0, n_full, body, (s, m), unroll=unroll)
        if cc_tail:
            xt = x_ref[b, pl.ds(n_full * cc, cc_tail), :].astype(jnp.float32)
            s = s + jnp.sum(xt, axis=0, keepdims=True)
            m = jnp.maximum(m, jnp.max(xt, axis=0, keepdims=True))
        return s * inv_c, m

    @pl.loop(0, n_sub)
    def _sub_block(bi):
        b0 = pl.multiple_of(bi * bb, bb)

        # ---- Pass 1: per batch row, channel mean/max staged into the padded
        # scratch (avg -> rows [0, bb), max -> rows [bb, 2*bb)).
        for bl in range(bb):
            avg, mx = channel_stats(b0 + bl)
            pad_ref[bl:bl + 1, base:base + HW] = avg
            pad_ref[bb + bl:bb + bl + 1, base:base + HW] = mx

        # ---- 2-in / 1-out KxK "same" conv, batched over the bb sub-block rows:
        #   conv[p] = sum_j mask_j(p) * sum_{c,i} w[c,i,j] * map_c[p + (i-pad)*W + (j-pad)]
        # The shifted reads come straight out of the padded scratch at flat
        # offset i*W + j (row overflow handled by the zero borders; column
        # wrap-around masked per j).  Only one tap accumulator / mask is live.
        conv = jnp.zeros((bb, HW), jnp.float32)
        for j in range(K):
            dj = j - pad
            t = jnp.zeros((bb, HW), jnp.float32)
            for c in range(2):
                r0 = c * bb
                for i in range(K):
                    off = i * W + j
                    t = t + w_ref[c, i * K + j] * pad_ref[r0:r0 + bb, off:off + HW]
            if dj == 0:
                conv = conv + t
            else:
                valid = (col >= -dj) & (col <= (W - 1) - dj)
                conv = conv + jnp.where(valid, 1.0, 0.0).astype(jnp.float32) * t

        att = jax.nn.sigmoid(conv)                      # (bb, HW) f32

        # ---- Pass 2: out = x * attention, re-streamed in cc chunks with
        # lane-dense stores; the attention broadcast is hoisted out of the loop.
        for bl in range(bb):
            b = b0 + bl
            att_row = att[bl:bl + 1, :]
            att_cc = jnp.broadcast_to(att_row, (cc, HW))

            def mul_body(k, carry, _b=b, _att=att_cc):
                c0 = pl.multiple_of(k * cc, cc)
                xc = x_ref[_b, pl.ds(c0, cc), :].astype(jnp.float32)
                o_ref[_b, pl.ds(c0, cc), :] = (xc * _att).astype(o_ref.dtype)
                return carry

            if n_full > 0:
                lax.fori_loop(0, n_full, mul_body, 0, unroll=unroll)
            if cc_tail:
                c0 = n_full * cc
                att_t = jnp.broadcast_to(att_row, (cc_tail, HW))
                xt = x_ref[b, pl.ds(c0, cc_tail), :].astype(jnp.float32)
                o_ref[b, pl.ds(c0, cc_tail), :] = (xt * att_t).astype(o_ref.dtype)


def spatial_attention(x, weight, kernel_size=7, io_dtype=None):
    """x: (N, C, H, W); weight: (1, 2, K, K) conv2d weight (no bias)."""
    assert kernel_size in (3, 7), "kernel size must be 3 or 7"
    K = kernel_size
    pad = (K - 1) // 2
    N, C, H, W = x.shape
    HW = H * W
    w_flat = weight.reshape(2, K * K).astype(jnp.float32)

    out_dtype = x.dtype
    if io_dtype is not None:
        # bf16 I/O path: halves HBM traffic; compute stays f32 in-kernel.
        x = x.astype(io_dtype)
    x_flat = x.reshape(N, C, HW)                        # free, contiguous
    itemsize = jnp.dtype(x_flat.dtype).itemsize

    cap, block_budget, vmem_limit, multi_tc = _vmem_config()

    # Batch elements per grid step: as big as the double-buffered in+out VMEM
    # budget allows; on multi-TensorCore chips keep >= 2 grid steps (N >= 2)
    # so both cores get work.
    per_elem = 2 * 2 * C * HW * itemsize                # dbl-buffered in + out
    nb_budget = max(1, block_budget // max(1, per_elem))
    nb_cap = min(N, nb_budget)
    if multi_tc and N >= 2:
        nb_cap = min(nb_cap, max(1, (N + 1) // 2))
    nb = _largest_divisor_leq(N, nb_cap)
    grid = (N // nb,)

    # Fixed channel chunk (8 sublanes of f32 compute) + static tail in-kernel.
    cc = min(8, C)
    n_full = C // cc
    unroll = True if n_full <= 8 else 4

    # Batch rows vectorized together in the conv/sigmoid section (vreg budget).
    bb = _largest_divisor_leq(nb, min(8, max(1, 2048 // HW)))
    n_sub = nb // bb

    base = pad * W + pad
    scratch_width = HW + 2 * base
    scratch_bytes = 4 * (2 * bb) * scratch_width

    # VMEM limit sized to what this call actually needs (generation-aware cap).
    needed = nb * per_elem + scratch_bytes + (2 << 20)
    hard_cap = int(0.9 * cap) if cap else 64 * 2**20
    vmem_limit = min(max(vmem_limit, needed), hard_cap)
    # If even one block can't double-buffer within the limit, fall back to
    # single-buffered blocks for the big operands.
    big_pipe = pl.Buffered(1) if needed > vmem_limit else None
    # TODO(synk): for shapes where a single (C, H*W) element exceeds VMEM even
    # single-buffered, split into an attention-map kernel + broadcast-multiply
    # kernel (not needed for typical CBAM feature maps).

    kernel = functools.partial(_spatial_attention_kernel, K=K, pad=pad, H=H,
                               W=W, cc=cc, bb=bb, n_sub=n_sub, unroll=unroll)

    cost = pl.CostEstimate(
        flops=int(N * HW * (3 * C + 4 * K * K + 8)),
        transcendentals=int(N * HW),
        bytes_accessed=int(2 * N * C * HW * itemsize + 2 * K * K * 4),
    )

    out_flat = pl.pallas_call(
        kernel,
        out_shape=jax.ShapeDtypeStruct((N, C, HW), x_flat.dtype),
        grid=grid,
        in_specs=[
            pl.BlockSpec(memory_space=pltpu.MemorySpace.SMEM),        # weights
            _block_spec((nb, C, HW), lambda g: (g, 0, 0), big_pipe),  # x block
        ],
        out_specs=_block_spec((nb, C, HW), lambda g: (g, 0, 0), big_pipe),
        scratch_shapes=[
            pltpu.VMEM((2 * bb, scratch_width), jnp.float32),  # padded avg/max
        ],
        input_output_aliases={1: 0},          # output aliases x (same blocks)
        compiler_params=pltpu.CompilerParams(
            dimension_semantics=("parallel",),
            vmem_limit_bytes=int(vmem_limit),
        ),
        cost_estimate=cost,
    )(w_flat, x_flat)

    out = out_flat.reshape(N, C, H, W)
    if out.dtype != out_dtype:
        out = out.astype(out_dtype)
    return out


def _reference(x, weight):
    # Pure-JAX reference matching the PyTorch module.
    avg_out = jnp.mean(x, axis=1, keepdims=True)
    max_out = jnp.max(x, axis=1, keepdims=True)
    feats = jnp.concatenate([avg_out, max_out], axis=1)
    pad = (weight.shape[-1] - 1) // 2
    conv = jax.lax.conv_general_dilated(
        feats, weight, window_strides=(1, 1),
        padding=[(pad, pad), (pad, pad)],
        dimension_numbers=("NCHW", "OIHW", "NCHW"))
    return x * jax.nn.sigmoid(conv)


if __name__ == "__main__":
    key = jax.random.PRNGKey(0)
    kx, kw = jax.random.split(key)

    N, C, H, W = 2, 4, 16, 16
    kernel_size = 7

    x = jax.random.normal(kx, (N, C, H, W), dtype=jnp.float32)
    fan_in = 2 * kernel_size * kernel_size
    weight = jax.random.uniform(
        kw, (1, 2, kernel_size, kernel_size), dtype=jnp.float32,
        minval=-1.0 / np.sqrt(fan_in), maxval=1.0 / np.sqrt(fan_in))

    out = jax.block_until_ready(spatial_attention(x, weight, kernel_size))
    ref = jax.block_until_ready(_reference(x, weight))

    assert out.shape == (N, C, H, W)
    np.testing.assert_allclose(np.asarray(out), np.asarray(ref),
                               rtol=1e-4, atol=1e-4)
    print("KERNEL_OK")
</pallas_src>

<mosaic_0001>
module attributes {stable_mosaic.version = 11 : i64} {
  func.func @_spatial_attention_kernel(%arg0: i32, %arg1: memref<2x49xf32, #tpu.memory_space<smem>>, %arg2: memref<1x4x256xf32, #tpu.memory_space<vmem>>, %arg3: memref<1x4x256xf32, #tpu.memory_space<vmem>>, %arg4: memref<2x358xf32, #tpu.memory_space<vmem>>) attributes {dimension_semantics = [#tpu.dimension_semantics<parallel>], iteration_bounds = array<i64: 2>, scalar_prefetch = 0 : i64, scratch_operands = 1 : i64, tpu.core_type = #tpu.core_type<tc>, window_params = [{transform_indices = @transform_0, window_bounds = array<i64: 2, 49>}, {transform_indices = @transform_1, window_bounds = array<i64: 1, 4, 256>}, {transform_indices = @transform_2, window_bounds = array<i64: 1, 4, 256>}]} {
    %cst = arith.constant 0.000000e+00 : f32
    %0 = vector.broadcast %cst : f32 to vector<2x51xf32>
    %c0 = arith.constant 0 : index
    %c0_0 = arith.constant 0 : index
    %1 = vector.load %arg4[%c0, %c0_0] : memref<2x358xf32, #tpu.memory_space<vmem>>, vector<2x51xf32>
    tpu.vector_store %arg4[%c0, %c0_0], %0 {strides = array<i32>} : memref<2x358xf32, #tpu.memory_space<vmem>>, vector<2x51xf32>,
    %cst_1 = arith.constant 0.000000e+00 : f32
    %2 = vector.broadcast %cst_1 : f32 to vector<2x51xf32>
    %c0_2 = arith.constant 0 : index
    %c307 = arith.constant 307 : index
    %3 = vector.load %arg4[%c0_2, %c307] : memref<2x358xf32, #tpu.memory_space<vmem>>, vector<2x51xf32>
    tpu.vector_store %arg4[%c0_2, %c307], %2 {strides = array<i32>} : memref<2x358xf32, #tpu.memory_space<vmem>>, vector<2x51xf32>,
    %4 = tpu.iota {dimensions = array<i32: 1>} : vector<1x256xi32>
    %c15_i32 = arith.constant 15 : i32
    %5 = vector.broadcast %c15_i32 : i32 to vector<1x256xi32>
    %6 = arith.andi %4, %5 : vector<1x256xi32>
    %cst_3 = arith.constant 2.500000e-01 : f32
    %c0_i32 = arith.constant 0 : i32
    %c1_i32 = arith.constant 1 : i32
    %7 = arith.muli %c0_i32, %c1_i32 : i32
    %c0_i32_4 = arith.constant 0 : i32
    %8 = arith.addi %c0_i32_4, %7 : i32
    %c1_i32_5 = arith.constant 1 : i32
    %9 = arith.muli %8, %c1_i32_5 : i32
    %10 = tpu.assume_multiple %9, 1 : i32
    %c0_i32_6 = arith.constant 0 : i32
    %11 = arith.addi %10, %c0_i32_6 : i32
    %cst_7 = arith.constant 0.000000e+00 : f32
    %12 = vector.broadcast %cst_7 : f32 to vector<1x256xf32>
    %cst_8 = arith.constant 0xFF800000 : f32
    %13 = vector.broadcast %cst_8 : f32 to vector<1x256xf32>
    %c0_i32_9 = arith.constant 0 : i32
    %c4_i32 = arith.constant 4 : i32
    %14 = arith.muli %c0_i32_9, %c4_i32 : i32
    %15 = tpu.assume_multiple %14, 4 : i32
    %16 = arith.index_cast %11 : i32 to index
    %17 = arith.index_cast %15 : i32 to index
    %c0_10 = arith.constant 0 : index
    %18 = vector.load %arg2[%16, %17, %c0_10] : memref<1x4x256xf32, #tpu.memory_space<vmem>>, vector<1x4x256xf32>
    %19 = vector.shape_cast %18 : vector<1x4x256xf32> to vector<4x256xf32>
    %cst_11 = arith.constant dense<0.000000e+00> : vector<256xf32>
    %20 = vector.multi_reduction <add>, %19, %cst_11 [0] : vector<4x256xf32> to vector<256xf32>
    %21 = vector.shape_cast %20 : vector<256xf32> to vector<1x256xf32>
    %22 = arith.addf %12, %21 : vector<1x256xf32>
    %cst_12 = arith.constant dense<0xFF800000> : vector<256xf32>
    %23 = vector.multi_reduction <maximumf>, %19, %cst_12 [0] : vector<4x256xf32> to vector<256xf32>
    %24 = vector.shape_cast %23 : vector<256xf32> to vector<1x256xf32>
    %25 = arith.maximumf %13, %24 : vector<1x256xf32>
    %c1_i32_13 = arith.constant 1 : i32
    %26 = vector.broadcast %cst_3 : f32 to vector<1x256xf32>
    %27 = arith.mulf %22, %26 : vector<1x256xf32>
    %c0_14 = arith.constant 0 : index
    %c51 = arith.constant 51 : index
    %28 = vector.load %arg4[%c0_14, %c51] : memref<2x358xf32, #tpu.memory_space<vmem>>, vector<1x256xf32>
    tpu.vector_store %arg4[%c0_14, %c51], %27 {strides = array<i32>} : memref<2x358xf32, #tpu.memory_space<vmem>>, vector<1x256xf32>,
    %c1 = arith.constant 1 : index
    %c51_15 = arith.constant 51 : index
    %29 = vector.load %arg4[%c1, %c51_15] : memref<2x358xf32, #tpu.memory_space<vmem>>, vector<1x256xf32>
    tpu.vector_store %arg4[%c1, %c51_15], %25 {strides = array<i32>} : memref<2x358xf32, #tpu.memory_space<vmem>>, vector<1x256xf32>,
    %cst_16 = arith.constant 0.000000e+00 : f32
    %30 = vector.broadcast %cst_16 : f32 to vector<1x256xf32>
    %cst_17 = arith.constant 0.000000e+00 : f32
    %31 = vector.broadcast %cst_17 : f32 to vector<1x256xf32>
    %c0_18 = arith.constant 0 : index
    %c0_19 = arith.constant 0 : index
    %32 = memref.load %arg1[%c0_18, %c0_19] : memref<2x49xf32, #tpu.memory_space<smem>>
    %c0_20 = arith.constant 0 : index
    %c0_21 = arith.constant 0 : index
    %33 = vector.load %arg4[%c0_20, %c0_21] : memref<2x358xf32, #tpu.memory_space<vmem>>, vector<1x256xf32>
    %34 = vector.broadcast %32 : f32 to vector<1x256xf32>
    %35 = arith.mulf %34, %33 : vector<1x256xf32>
    %36 = arith.addf %31, %35 : vector<1x256xf32>
    %c0_22 = arith.constant 0 : index
    %c7 = arith.constant 7 : index
    %37 = memref.load %arg1[%c0_22, %c7] : memref<2x49xf32, #tpu.memory_space<smem>>
    %c0_23 = arith.constant 0 : index
    %c16 = arith.constant 16 : index
    %38 = vector.load %arg4[%c0_23, %c16] : memref<2x358xf32, #tpu.memory_space<vmem>>, vector<1x256xf32>
    %39 = vector.broadcast %37 : f32 to vector<1x256xf32>
    %40 = arith.mulf %39, %38 : vector<1x256xf32>
    %41 = arith.addf %36, %40 : vector<1x256xf32>
    %c0_24 = arith.constant 0 : index
    %c14 = arith.constant 14 : index
    %42 = memref.load %arg1[%c0_24, %c14] : memref<2x49xf32, #tpu.memory_space<smem>>
    %c0_25 = arith.constant 0 : index
    %c32 = arith.constant 32 : index
    %43 = vector.load %arg4[%c0_25, %c32] : memref<2x358xf32, #tpu.memory_space<vmem>>, vector<1x256xf32>
    %44 = vector.broadcast %42 : f32 to vector<1x256xf32>
    %45 = arith.mulf %44, %43 : vector<1x256xf32>
    %46 = arith.addf %41, %45 : vector<1x256xf32>
    %c0_26 = arith.constant 0 : index
    %c21 = arith.constant 21 : index
    %47 = memref.load %arg1[%c0_26, %c21] : memref<2x49xf32, #tpu.memory_space<smem>>
    %c0_27 = arith.constant 0 : index
    %c48 = arith.constant 48 : index
    %48 = vector.load %arg4[%c0_27, %c48] : memref<2x358xf32, #tpu.memory_space<vmem>>, vector<1x256xf32>
    %49 = vector.broadcast %47 : f32 to vector<1x256xf32>
    %50 = arith.mulf %49, %48 : vector<1x256xf32>
    %51 = arith.addf %46, %50 : vector<1x256xf32>
    %c0_28 = arith.constant 0 : index
    %c28 = arith.constant 28 : index
    %52 = memref.load %arg1[%c0_28, %c28] : memref<2x49xf32, #tpu.memory_space<smem>>
    %c0_29 = arith.constant 0 : index
    %c64 = arith.constant 64 : index
    %53 = vector.load %arg4[%c0_29, %c64] : memref<2x358xf32, #tpu.memory_space<vmem>>, vector<1x256xf32>
    %54 = vector.broadcast %52 : f32 to vector<1x256xf32>
    %55 = arith.mulf %54, %53 : vector<1x256xf32>
    %56 = arith.addf %51, %55 : vector<1x256xf32>
    %c0_30 = arith.constant 0 : index
    %c35 = arith.constant 35 : index
    %57 = memref.load %arg1[%c0_30, %c35] : memref<2x49xf32, #tpu.memory_space<smem>>
    %c0_31 = arith.constant 0 : index
    %c80 = arith.constant 80 : index
    %58 = vector.load %arg4[%c0_31, %c80] : memref<2x358xf32, #tpu.memory_space<vmem>>, vector<1x256xf32>
    %59 = vector.broadcast %57 : f32 to vector<1x256xf32>
    %60 = arith.mulf %59, %58 : vector<1x256xf32>
    %61 = arith.addf %56, %60 : vector<1x256xf32>
    %c0_32 = arith.constant 0 : index
    %c42 = arith.constant 42 : index
    %62 = memref.load %arg1[%c0_32, %c42] : memref<2x49xf32, #tpu.memory_space<smem>>
    %c0_33 = arith.constant 0 : index
    %c96 = arith.constant 96 : index
    %63 = vector.load %arg4[%c0_33, %c96] : memref<2x358xf32, #tpu.memory_space<vmem>>, vector<1x256xf32>
    %64 = vector.broadcast %62 : f32 to vector<1x256xf32>
    %65 = arith.mulf %64, %63 : vector<1x256xf32>
    %66 = arith.addf %61, %65 : vector<1x256xf32>
    %c1_34 = arith.constant 1 : index
    %c0_35 = arith.constant 0 : index
    %67 = memref.load %arg1[%c1_34, %c0_35] : memref<2x49xf32, #tpu.memory_space<smem>>
    %c1_36 = arith.constant 1 : index
    %c0_37 = arith.constant 0 : index
    %68 = vector.load %arg4[%c1_36, %c0_37] : memref<2x358xf32, #tpu.memory_space<vmem>>, vector<1x256xf32>
    %69 = vector.broadcast %67 : f32 to vector<1x256xf32>
    %70 = arith.mulf %69, %68 : vector<1x256xf32>
    %71 = arith.addf %66, %70 : vector<1x256xf32>
    %c1_38 = arith.constant 1 : index
    %c7_39 = arith.constant 7 : index
    %72 = memref.load %arg1[%c1_38, %c7_39] : memref<2x49xf32, #tpu.memory_space<smem>>
    %c1_40 = arith.constant 1 : index
    %c16_41 = arith.constant 16 : index
    %73 = vector.load %arg4[%c1_40, %c16_41] : memref<2x358xf32, #tpu.memory_space<vmem>>, vector<1x256xf32>
    %74 = vector.broadcast %72 : f32 to vector<1x256xf32>
    %75 = arith.mulf %74, %73 : vector<1x256xf32>
    %76 = arith.addf %71, %75 : vector<1x256xf32>
    %c1_42 = arith.constant 1 : index
    %c14_43 = arith.constant 14 : index
    %77 = memref.load %arg1[%c1_42, %c14_43] : memref<2x49xf32, #tpu.memory_space<smem>>
    %c1_44 = arith.constant 1 : index
    %c32_45 = arith.constant 32 : index
    %78 = vector.load %arg4[%c1_44, %c32_45] : memref<2x358xf32, #tpu.memory_space<vmem>>, vector<1x256xf32>
    %79 = vector.broadcast %77 : f32 to vector<1x256xf32>
    %80 = arith.mulf %79, %78 : vector<1x256xf32>
    %81 = arith.addf %76, %80 : vector<1x256xf32>
    %c1_46 = arith.constant 1 : index
    %c21_47 = arith.constant 21 : index
    %82 = memref.load %arg1[%c1_46, %c21_47] : memref<2x49xf32, #tpu.memory_space<smem>>
    %c1_48 = arith.constant 1 : index
    %c48_49 = arith.constant 48 : index
    %83 = vector.load %arg4[%c1_48, %c48_49] : memref<2x358xf32, #tpu.memory_space<vmem>>, vector<1x256xf32>
    %84 = vector.broadcast %82 : f32 to vector<1x256xf32>
    %85 = arith.mulf %84, %83 : vector<1x256xf32>
    %86 = arith.addf %81, %85 : vector<1x256xf32>
    %c1_50 = arith.constant 1 : index
    %c28_51 = arith.constant 28 : index
    %87 = memref.load %arg1[%c1_50, %c28_51] : memref<2x49xf32, #tpu.memory_space<smem>>
    %c1_52 = arith.constant 1 : index
    %c64_53 = arith.constant 64 : index
    %88 = vector.load %arg4[%c1_52, %c64_53] : memref<2x358xf32, #tpu.memory_space<vmem>>, vector<1x256xf32>
    %89 = vector.broadcast %87 : f32 to vector<1x256xf32>
    %90 = arith.mulf %89, %88 : vector<1x256xf32>
    %91 = arith.addf %86, %90 : vector<1x256xf32>
    %c1_54 = arith.constant 1 : index
    %c35_55 = arith.constant 35 : index
    %92 = memref.load %arg1[%c1_54, %c35_55] : memref<2x49xf32, #tpu.memory_space<smem>>
    %c1_56 = arith.constant 1 : index
    %c80_57 = arith.constant 80 : index
    %93 = vector.load %arg4[%c1_56, %c80_57] : memref<2x358xf32, #tpu.memory_space<vmem>>, vector<1x256xf32>
    %94 = vector.broadcast %92 : f32 to vector<1x256xf32>
    %95 = arith.mulf %94, %93 : vector<1x256xf32>
    %96 = arith.addf %91, %95 : vector<1x256xf32>
    %c1_58 = arith.constant 1 : index
    %c42_59 = arith.constant 42 : index
    %97 = memref.load %arg1[%c1_58, %c42_59] : memref<2x49xf32, #tpu.memory_space<smem>>
    %c1_60 = arith.constant 1 : index
    %c96_61 = arith.constant 96 : index
    %98 = vector.load %arg4[%c1_60, %c96_61] : memref<2x358xf32, #tpu.memory_space<vmem>>, vector<1x256xf32>
    %99 = vector.broadcast %97 : f32 to vector<1x256xf32>
    %100 = arith.mulf %99, %98 : vector<1x256xf32>
    %101 = arith.addf %96, %100 : vector<1x256xf32>
    %c3_i32 = arith.constant 3 : i32
    %102 = vector.broadcast %c3_i32 : i32 to vector<1x256xi32>
    %103 = arith.cmpi sge, %6, %102 : vector<1x256xi32>
    %c18_i32 = arith.constant 18 : i32
    %104 = vector.broadcast %c18_i32 : i32 to vector<1x256xi32>
    %105 = arith.cmpi sle, %6, %104 : vector<1x256xi32>
    %106 = arith.andi %103, %105 : vector<1x256xi1>
    %cst_62 = arith.constant 1.000000e+00 : f32
    %cst_63 = arith.constant 0.000000e+00 : f32
    %107 = vector.broadcast %cst_62 : f32 to vector<1x256xf32>
    %108 = vector.broadcast %cst_63 : f32 to vector<1x256xf32>
    %109 = arith.select %106, %107, %108 : vector<1x256xi1>, vector<1x256xf32>
    %110 = arith.mulf %109, %101 : vector<1x256xf32>
    %111 = arith.addf %30, %110 : vector<1x256xf32>
    %cst_64 = arith.constant 0.000000e+00 : f32
    %112 = vector.broadcast %cst_64 : f32 to vector<1x256xf32>
    %c0_65 = arith.constant 0 : index
    %c1_66 = arith.constant 1 : index
    %113 = memref.load %arg1[%c0_65, %c1_66] : memref<2x49xf32, #tpu.memory_space<smem>>
    %c0_67 = arith.constant 0 : index
    %c1_68 = arith.constant 1 : index
    %114 = vector.load %arg4[%c0_67, %c1_68] : memref<2x358xf32, #tpu.memory_space<vmem>>, vector<1x256xf32>
    %115 = vector.broadcast %113 : f32 to vector<1x256xf32>
    %116 = arith.mulf %115, %114 : vector<1x256xf32>
    %117 = arith.addf %112, %116 : vector<1x256xf32>
    %c0_69 = arith.constant 0 : index
    %c8 = arith.constant 8 : index
    %118 = memref.load %arg1[%c0_69, %c8] : memref<2x49xf32, #tpu.memory_space<smem>>
    %c0_70 = arith.constant 0 : index
    %c17 = arith.constant 17 : index
    %119 = vector.load %arg4[%c0_70, %c17] : memref<2x358xf32, #tpu.memory_space<vmem>>, vector<1x256xf32>
    %120 = vector.broadcast %118 : f32 to vector<1x256xf32>
    %121 = arith.mulf %120, %119 : vector<1x256xf32>
    %122 = arith.addf %117, %121 : vector<1x256xf32>
    %c0_71 = arith.constant 0 : index
    %c15 = arith.constant 15 : index
    %123 = memref.load %arg1[%c0_71, %c15] : memref<2x49xf32, #tpu.memory_space<smem>>
    %c0_72 = arith.constant 0 : index
    %c33 = arith.constant 33 : index
    %124 = vector.load %arg4[%c0_72, %c33] : memref<2x358xf32, #tpu.memory_space<vmem>>, vector<1x256xf32>
    %125 = vector.broadcast %123 : f32 to vector<1x256xf32>
    %126 = arith.mulf %125, %124 : vector<1x256xf32>
    %127 = arith.addf %122, %126 : vector<1x256xf32>
    %c0_73 = arith.constant 0 : index
    %c22 = arith.constant 22 : index
    %128 = memref.load %arg1[%c0_73, %c22] : memref<2x49xf32, #tpu.memory_space<smem>>
    %c0_74 = arith.constant 0 : index
    %c49 = arith.constant 49 : index
    %129 = vector.load %arg4[%c0_74, %c49] : memref<2x358xf32, #tpu.memory_space<vmem>>, vector<1x256xf32>
    %130 = vector.broadcast %128 : f32 to vector<1x256xf32>
    %131 = arith.mulf %130, %129 : vector<1x256xf32>
    %132 = arith.addf %127, %131 : vector<1x256xf32>
    %c0_75 = arith.constant 0 : index
    %c29 = arith.constant 29 : index
    %133 = memref.load %arg1[%c0_75, %c29] : memref<2x49xf32, #tpu.memory_space<smem>>
    %c0_76 = arith.constant 0 : index
    %c65 = arith.constant 65 : index
    %134 = vector.load %arg4[%c0_76, %c65] : memref<2x358xf32, #tpu.memory_space<vmem>>, vector<1x256xf32>
    %135 = vector.broadcast %133 : f32 to vector<1x256xf32>
    %136 = arith.mulf %135, %134 : vector<1x256xf32>
    %137 = arith.addf %132, %136 : vector<1x256xf32>
    %c0_77 = arith.constant 0 : index
    %c36 = arith.constant 36 : index
    %138 = memref.load %arg1[%c0_77, %c36] : memref<2x49xf32, #tpu.memory_space<smem>>
    %c0_78 = arith.constant 0 : index
    %c81 = arith.constant 81 : index
    %139 = vector.load %arg4[%c0_78, %c81] : memref<2x358xf32, #tpu.memory_space<vmem>>, vector<1x256xf32>
    %140 = vector.broadcast %138 : f32 to vector<1x256xf32>
    %141 = arith.mulf %140, %139 : vector<1x256xf32>
    %142 = arith.addf %137, %141 : vector<1x256xf32>
    %c0_79 = arith.constant 0 : index
    %c43 = arith.constant 43 : index
    %143 = memref.load %arg1[%c0_79, %c43] : memref<2x49xf32, #tpu.memory_space<smem>>
    %c0_80 = arith.constant 0 : index
    %c97 = arith.constant 97 : index
    %144 = vector.load %arg4[%c0_80, %c97] : memref<2x358xf32, #tpu.memory_space<vmem>>, vector<1x256xf32>
    %145 = vector.broadcast %143 : f32 to vector<1x256xf32>
    %146 = arith.mulf %145, %144 : vector<1x256xf32>
    %147 = arith.addf %142, %146 : vector<1x256xf32>
    %c1_81 = arith.constant 1 : index
    %c1_82 = arith.constant 1 : index
    %148 = memref.load %arg1[%c1_81, %c1_82] : memref<2x49xf32, #tpu.memory_space<smem>>
    %c1_83 = arith.constant 1 : index
    %c1_84 = arith.constant 1 : index
    %149 = vector.load %arg4[%c1_83, %c1_84] : memref<2x358xf32, #tpu.memory_space<vmem>>, vector<1x256xf32>
    %150 = vector.broadcast %148 : f32 to vector<1x256xf32>
    %151 = arith.mulf %150, %149 : vector<1x256xf32>
    %152 = arith.addf %147, %151 : vector<1x256xf32>
    %c1_85 = arith.constant 1 : index
    %c8_86 = arith.constant 8 : index
    %153 = memref.load %arg1[%c1_85, %c8_86] : memref<2x49xf32, #tpu.memory_space<smem>>
    %c1_87 = arith.constant 1 : index
    %c17_88 = arith.constant 17 : index
    %154 = vector.load %arg4[%c1_87, %c17_88] : memref<2x358xf32, #tpu.memory_space<vmem>>, vector<1x256xf32>
    %155 = vector.broadcast %153 : f32 to vector<1x256xf32>
    %156 = arith.mulf %155, %154 : vector<1x256xf32>
    %157 = arith.addf %152, %156 : vector<1x256xf32>
    %c1_89 = arith.constant 1 : index
    %c15_90 = arith.constant 15 : index
    %158 = memref.load %arg1[%c1_89, %c15_90] : memref<2x49xf32, #tpu.memory_space<smem>>
    %c1_91 = arith.constant 1 : index
    %c33_92 = arith.constant 33 : index
    %159 = vector.load %arg4[%c1_91, %c33_92] : memref<2x358xf32, #tpu.memory_space<vmem>>, vector<1x256xf32>
    %160 = vector.broadcast %158 : f32 to vector<1x256xf32>
    %161 = arith.mulf %160, %159 : vector<1x256xf32>
    %162 = arith.addf %157, %161 : vector<1x256xf32>
    %c1_93 = arith.constant 1 : index
    %c22_94 = arith.constant 22 : index
    %163 = memref.load %arg1[%c1_93, %c22_94] : memref<2x49xf32, #tpu.memory_space<smem>>
    %c1_95 = arith.constant 1 : index
    %c49_96 = arith.constant 49 : index
    %164 = vector.load %arg4[%c1_95, %c49_96] : memref<2x358xf32, #tpu.memory_space<vmem>>, vector<1x256xf32>
    %165 = vector.broadcast %163 : f32 to vector<1x256xf32>
    %166 = arith.mulf %165, %164 : vector<1x256xf32>
    %167 = arith.addf %162, %166 : vector<1x256xf32>
    %c1_97 = arith.constant 1 : index
    %c29_98 = arith.constant 29 : index
    %168 = memref.load %arg1[%c1_97, %c29_98] : memref<2x49xf32, #tpu.memory_space<smem>>
    %c1_99 = arith.constant 1 : index
    %c65_100 = arith.constant 65 : index
    %169 = vector.load %arg4[%c1_99, %c65_100] : memref<2x358xf32, #tpu.memory_space<vmem>>, vector<1x256xf32>
    %170 = vector.broadcast %168 : f32 to vector<1x256xf32>
    %171 = arith.mulf %170, %169 : vector<1x256xf32>
    %172 = arith.addf %167, %171 : vector<1x256xf32>
    %c1_101 = arith.constant 1 : index
    %c36_102 = arith.constant 36 : index
    %173 = memref.load %arg1[%c1_101, %c36_102] : memref<2x49xf32, #tpu.memory_space<smem>>
    %c1_103 = arith.constant 1 : index
    %c81_104 = arith.constant 81 : index
    %174 = vector.load %arg4[%c1_103, %c81_104] : memref<2x358xf32, #tpu.memory_space<vmem>>, vector<1x256xf32>
    %175 = vector.broadcast %173 : f32 to vector<1x256xf32>
    %176 = arith.mulf %175, %174 : vector<1x256xf32>
    %177 = arith.addf %172, %176 : vector<1x256xf32>
    %c1_105 = arith.constant 1 : index
    %c43_106 = arith.constant 43 : index
    %178 = memref.load %arg1[%c1_105, %c43_106] : memref<2x49xf32, #tpu.memory_space<smem>>
    %c1_107 = arith.constant 1 : index
    %c97_108 = arith.constant 97 : index
    %179 = vector.load %arg4[%c1_107, %c97_108] : memref<2x358xf32, #tpu.memory_space<vmem>>, vector<1x256xf32>
    %180 = vector.broadcast %178 : f32 to vector<1x256xf32>
    %181 = arith.mulf %180, %179 : vector<1x256xf32>
    %182 = arith.addf %177, %181 : vector<1x256xf32>
    %c2_i32 = arith.constant 2 : i32
    %183 = vector.broadcast %c2_i32 : i32 to vector<1x256xi32>
    %184 = arith.cmpi sge, %6, %183 : vector<1x256xi32>
    %c17_i32 = arith.constant 17 : i32
    %185 = vector.broadcast %c17_i32 : i32 to vector<1x256xi32>
    %186 = arith.cmpi sle, %6, %185 : vector<1x256xi32>
    %187 = arith.andi %184, %186 : vector<1x256xi1>
    %cst_109 = arith.constant 1.000000e+00 : f32
    %cst_110 = arith.constant 0.000000e+00 : f32
    %188 = vector.broadcast %cst_109 : f32 to vector<1x256xf32>
    %189 = vector.broadcast %cst_110 : f32 to vector<1x256xf32>
    %190 = arith.select %187, %188, %189 : vector<1x256xi1>, vector<1x256xf32>
    %191 = arith.mulf %190, %182 : vector<1x256xf32>
    %192 = arith.addf %111, %191 : vector<1x256xf32>
    %cst_111 = arith.constant 0.000000e+00 : f32
    %193 = vector.broadcast %cst_111 : f32 to vector<1x256xf32>
    %c0_112 = arith.constant 0 : index
    %c2 = arith.constant 2 : index
    %194 = memref.load %arg1[%c0_112, %c2] : memref<2x49xf32, #tpu.memory_space<smem>>
    %c0_113 = arith.constant 0 : index
    %c2_114 = arith.constant 2 : index
    %195 = vector.load %arg4[%c0_113, %c2_114] : memref<2x358xf32, #tpu.memory_space<vmem>>, vector<1x256xf32>
    %196 = vector.broadcast %194 : f32 to vector<1x256xf32>
    %197 = arith.mulf %196, %195 : vector<1x256xf32>
    %198 = arith.addf %193, %197 : vector<1x256xf32>
    %c0_115 = arith.constant 0 : index
    %c9 = arith.constant 9 : index
    %199 = memref.load %arg1[%c0_115, %c9] : memref<2x49xf32, #tpu.memory_space<smem>>
    %c0_116 = arith.constant 0 : index
    %c18 = arith.constant 18 : index
    %200 = vector.load %arg4[%c0_116, %c18] : memref<2x358xf32, #tpu.memory_space<vmem>>, vector<1x256xf32>
    %201 = vector.broadcast %199 : f32 to vector<1x256xf32>
    %202 = arith.mulf %201, %200 : vector<1x256xf32>
    %203 = arith.addf %198, %202 : vector<1x256xf32>
    %c0_117 = arith.constant 0 : index
    %c16_118 = arith.constant 16 : index
    %204 = memref.load %arg1[%c0_117, %c16_118] : memref<2x49xf32, #tpu.memory_space<smem>>
    %c0_119 = arith.constant 0 : index
    %c34 = arith.constant 34 : index
    %205 = vector.load %arg4[%c0_119, %c34] : memref<2x358xf32, #tpu.memory_space<vmem>>, vector<1x256xf32>
    %206 = vector.broadcast %204 : f32 to vector<1x256xf32>
    %207 = arith.mulf %206, %205 : vector<1x256xf32>
    %208 = arith.addf %203, %207 : vector<1x256xf32>
    %c0_120 = arith.constant 0 : index
    %c23 = arith.constant 23 : index
    %209 = memref.load %arg1[%c0_120, %c23] : memref<2x49xf32, #tpu.memory_space<smem>>
    %c0_121 = arith.constant 0 : index
    %c50 = arith.constant 50 : index
    %210 = vector.load %arg4[%c0_121, %c50] : memref<2x358xf32, #tpu.memory_space<vmem>>, vector<1x256xf32>
    %211 = vector.broadcast %209 : f32 to vector<1x256xf32>
    %212 = arith.mulf %211, %210 : vector<1x256xf32>
    %213 = arith.addf %208, %212 : vector<1x256xf32>
    %c0_122 = arith.constant 0 : index
    %c30 = arith.constant 30 : index
    %214 = memref.load %arg1[%c0_122, %c30] : memref<2x49xf32, #tpu.memory_space<smem>>
    %c0_123 = arith.constant 0 : index
    %c66 = arith.constant 66 : index
    %215 = vector.load %arg4[%c0_123, %c66] : memref<2x358xf32, #tpu.memory_space<vmem>>, vector<1x256xf32>
    %216 = vector.broadcast %214 : f32 to vector<1x256xf32>
    %217 = arith.mulf %216, %215 : vector<1x256xf32>
    %218 = arith.addf %213, %217 : vector<1x256xf32>
    %c0_124 = arith.constant 0 : index
    %c37 = arith.constant 37 : index
    %219 = memref.load %arg1[%c0_124, %c37] : memref<2x49xf32, #tpu.memory_space<smem>>
    %c0_125 = arith.constant 0 : index
    %c82 = arith.constant 82 : index
    %220 = vector.load %arg4[%c0_125, %c82] : memref<2x358xf32, #tpu.memory_space<vmem>>, vector<1x256xf32>
    %221 = vector.broadcast %219 : f32 to vector<1x256xf32>
    %222 = arith.mulf %221, %220 : vector<1x256xf32>
    %223 = arith.addf %218, %222 : vector<1x256xf32>
    %c0_126 = arith.constant 0 : index
    %c44 = arith.constant 44 : index
    %224 = memref.load %arg1[%c0_126, %c44] : memref<2x49xf32, #tpu.memory_space<smem>>
    %c0_127 = arith.constant 0 : index
    %c98 = arith.constant 98 : index
    %225 = vector.load %arg4[%c0_127, %c98] : memref<2x358xf32, #tpu.memory_space<vmem>>, vector<1x256xf32>
    %226 = vector.broadcast %224 : f32 to vector<1x256xf32>
    %227 = arith.mulf %226, %225 : vector<1x256xf32>
    %228 = arith.addf %223, %227 : vector<1x256xf32>
    %c1_128 = arith.constant 1 : index
    %c2_129 = arith.constant 2 : index
    %229 = memref.load %arg1[%c1_128, %c2_129] : memref<2x49xf32, #tpu.memory_space<smem>>
    %c1_130 = arith.constant 1 : index
    %c2_131 = arith.constant 2 : index
    %230 = vector.load %arg4[%c1_130, %c2_131] : memref<2x358xf32, #tpu.memory_space<vmem>>, vector<1x256xf32>
    %231 = vector.broadcast %229 : f32 to vector<1x256xf32>
    %232 = arith.mulf %231, %230 : vector<1x256xf32>
    %233 = arith.addf %228, %232 : vector<1x256xf32>
    %c1_132 = arith.constant 1 : index
    %c9_133 = arith.constant 9 : index
    %234 = memref.load %arg1[%c1_132, %c9_133] : memref<2x49xf32, #tpu.memory_space<smem>>
    %c1_134 = arith.constant 1 : index
    %c18_135 = arith.constant 18 : index
    %235 = vector.load %arg4[%c1_134, %c18_135] : memref<2x358xf32, #tpu.memory_space<vmem>>, vector<1x256xf32>
    %236 = vector.broadcast %234 : f32 to vector<1x256xf32>
    %237 = arith.mulf %236, %235 : vector<1x256xf32>
    %238 = arith.addf %233, %237 : vector<1x256xf32>
    %c1_136 = arith.constant 1 : index
    %c16_137 = arith.constant 16 : index
    %239 = memref.load %arg1[%c1_136, %c16_137] : memref<2x49xf32, #tpu.memory_space<smem>>
    %c1_138 = arith.constant 1 : index
    %c34_139 = arith.constant 34 : index
    %240 = vector.load %arg4[%c1_138, %c34_139] : memref<2x358xf32, #tpu.memory_space<vmem>>, vector<1x256xf32>
    %241 = vector.broadcast %239 : f32 to vector<1x256xf32>
    %242 = arith.mulf %241, %240 : vector<1x256xf32>
    %243 = arith.addf %238, %242 : vector<1x256xf32>
    %c1_140 = arith.constant 1 : index
    %c23_141 = arith.constant 23 : index
    %244 = memref.load %arg1[%c1_140, %c23_141] : memref<2x49xf32, #tpu.memory_space<smem>>
    %c1_142 = arith.constant 1 : index
    %c50_143 = arith.constant 50 : index
    %245 = vector.load %arg4[%c1_142, %c50_143] : memref<2x358xf32, #tpu.memory_space<vmem>>, vector<1x256xf32>
    %246 = vector.broadcast %244 : f32 to vector<1x256xf32>
    %247 = arith.mulf %246, %245 : vector<1x256xf32>
    %248 = arith.addf %243, %247 : vector<1x256xf32>
    %c1_144 = arith.constant 1 : index
    %c30_145 = arith.constant 30 : index
    %249 = memref.load %arg1[%c1_144, %c30_145] : memref<2x49xf32, #tpu.memory_space<smem>>
    %c1_146 = arith.constant 1 : index
    %c66_147 = arith.constant 66 : index
    %250 = vector.load %arg4[%c1_146, %c66_147] : memref<2x358xf32, #tpu.memory_space<vmem>>, vector<1x256xf32>
    %251 = vector.broadcast %249 : f32 to vector<1x256xf32>
    %252 = arith.mulf %251, %250 : vector<1x256xf32>
    %253 = arith.addf %248, %252 : vector<1x256xf32>
    %c1_148 = arith.constant 1 : index
    %c37_149 = arith.constant 37 : index
    %254 = memref.load %arg1[%c1_148, %c37_149] : memref<2x49xf32, #tpu.memory_space<smem>>
    %c1_150 = arith.constant 1 : index
    %c82_151 = arith.constant 82 : index
    %255 = vector.load %arg4[%c1_150, %c82_151] : memref<2x358xf32, #tpu.memory_space<vmem>>, vector<1x256xf32>
    %256 = vector.broadcast %254 : f32 to vector<1x256xf32>
    %257 = arith.mulf %256, %255 : vector<1x256xf32>
    %258 = arith.addf %253, %257 : vector<1x256xf32>
    %c1_152 = arith.constant 1 : index
    %c44_153 = arith.constant 44 : index
    %259 = memref.load %arg1[%c1_152, %c44_153] : memref<2x49xf32, #tpu.memory_space<smem>>
    %c1_154 = arith.constant 1 : index
    %c98_155 = arith.constant 98 : index
    %260 = vector.load %arg4[%c1_154, %c98_155] : memref<2x358xf32, #tpu.memory_space<vmem>>, vector<1x256xf32>
    %261 = vector.broadcast %259 : f32 to vector<1x256xf32>
    %262 = arith.mulf %261, %260 : vector<1x256xf32>
    %263 = arith.addf %258, %262 : vector<1x256xf32>
    %c1_i32_156 = arith.constant 1 : i32
    %264 = vector.broadcast %c1_i32_156 : i32 to vector<1x256xi32>
    %265 = arith.cmpi sge, %6, %264 : vector<1x256xi32>
    %c16_i32 = arith.constant 16 : i32
    %266 = vector.broadcast %c16_i32 : i32 to vector<1x256xi32>
    %267 = arith.cmpi sle, %6, %266 : vector<1x256xi32>
    %268 = arith.andi %265, %267 : vector<1x256xi1>
    %cst_157 = arith.constant 1.000000e+00 : f32
    %cst_158 = arith.constant 0.000000e+00 : f32
    %269 = vector.broadcast %cst_157 : f32 to vector<1x256xf32>
    %270 = vector.broadcast %cst_158 : f32 to vector<1x256xf32>
    %271 = arith.select %268, %269, %270 : vector<1x256xi1>, vector<1x256xf32>
    %272 = arith.mulf %271, %263 : vector<1x256xf32>
    %273 = arith.addf %192, %272 : vector<1x256xf32>
    %cst_159 = arith.constant 0.000000e+00 : f32
    %274 = vector.broadcast %cst_159 : f32 to vector<1x256xf32>
    %c0_160 = arith.constant 0 : index
    %c3 = arith.constant 3 : index
    %275 = memref.load %arg1[%c0_160, %c3] : memref<2x49xf32, #tpu.memory_space<smem>>
    %c0_161 = arith.constant 0 : index
    %c3_162 = arith.constant 3 : index
    %276 = vector.load %arg4[%c0_161, %c3_162] : memref<2x358xf32, #tpu.memory_space<vmem>>, vector<1x256xf32>
    %277 = vector.broadcast %275 : f32 to vector<1x256xf32>
    %278 = arith.mulf %277, %276 : vector<1x256xf32>
    %279 = arith.addf %274, %278 : vector<1x256xf32>
    %c0_163 = arith.constant 0 : index
    %c10 = arith.constant 10 : index
    %280 = memref.load %arg1[%c0_163, %c10] : memref<2x49xf32, #tpu.memory_space<smem>>
    %c0_164 = arith.constant 0 : index
    %c19 = arith.constant 19 : index
    %281 = vector.load %arg4[%c0_164, %c19] : memref<2x358xf32, #tpu.memory_space<vmem>>, vector<1x256xf32>
    %282 = vector.broadcast %280 : f32 to vector<1x256xf32>
    %283 = arith.mulf %282, %281 : vector<1x256xf32>
    %284 = arith.addf %279, %283 : vector<1x256xf32>
    %c0_165 = arith.constant 0 : index
    %c17_166 = arith.constant 17 : index
    %285 = memref.load %arg1[%c0_165, %c17_166] : memref<2x49xf32, #tpu.memory_space<smem>>
    %c0_167 = arith.constant 0 : index
    %c35_168 = arith.constant 35 : index
    %286 = vector.load %arg4[%c0_167, %c35_168] : memref<2x358xf32, #tpu.memory_space<vmem>>, vector<1x256xf32>
    %287 = vector.broadcast %285 : f32 to vector<1x256xf32>
    %288 = arith.mulf %287, %286 : vector<1x256xf32>
    %289 = arith.addf %284, %288 : vector<1x256xf32>
    %c0_169 = arith.constant 0 : index
    %c24 = arith.constant 24 : index
    %290 = memref.load %arg1[%c0_169, %c24] : memref<2x49xf32, #tpu.memory_space<smem>>
    %c0_170 = arith.constant 0 : index
    %c51_171 = arith.constant 51 : index
    %291 = vector.load %arg4[%c0_170, %c51_171] : memref<2x358xf32, #tpu.memory_space<vmem>>, vector<1x256xf32>
    %292 = vector.broadcast %290 : f32 to vector<1x256xf32>
    %293 = arith.mulf %292, %291 : vector<1x256xf32>
    %294 = arith.addf %289, %293 : vector<1x256xf32>
    %c0_172 = arith.constant 0 : index
    %c31 = arith.constant 31 : index
    %295 = memref.load %arg1[%c0_172, %c31] : memref<2x49xf32, #tpu.memory_space<smem>>
    %c0_173 = arith.constant 0 : index
    %c67 = arith.constant 67 : index
    %296 = vector.load %arg4[%c0_173, %c67] : memref<2x358xf32, #tpu.memory_space<vmem>>, vector<1x256xf32>
    %297 = vector.broadcast %295 : f32 to vector<1x256xf32>
    %298 = arith.mulf %297, %296 : vector<1x256xf32>
    %299 = arith.addf %294, %298 : vector<1x256xf32>
    %c0_174 = arith.constant 0 : index
    %c38 = arith.constant 38 : index
    %300 = memref.load %arg1[%c0_174, %c38] : memref<2x49xf32, #tpu.memory_space<smem>>
    %c0_175 = arith.constant 0 : index
    %c83 = arith.constant 83 : index
    %301 = vector.load %arg4[%c0_175, %c83] : memref<2x358xf32, #tpu.memory_space<vmem>>, vector<1x256xf32>
    %302 = vector.broadcast %300 : f32 to vector<1x256xf32>
    %303 = arith.mulf %302, %301 : vector<1x256xf32>
    %304 = arith.addf %299, %303 : vector<1x256xf32>
    %c0_176 = arith.constant 0 : index
    %c45 = arith.constant 45 : index
    %305 = memref.load %arg1[%c0_176, %c45] : memref<2x49xf32, #tpu.memory_space<smem>>
    %c0_177 = arith.constant 0 : index
    %c99 = arith.constant 99 : index
    %306 = vector.load %arg4[%c0_177, %c99] : memref<2x358xf32, #tpu.memory_space<vmem>>, vector<1x256xf32>
    %307 = vector.broadcast %305 : f32 to vector<1x256xf32>
    %308 = arith.mulf %307, %306 : vector<1x256xf32>
    %309 = arith.addf %304, %308 : vector<1x256xf32>
    %c1_178 = arith.constant 1 : index
    %c3_179 = arith.constant 3 : index
    %310 = memref.load %arg1[%c1_178, %c3_179] : memref<2x49xf32, #tpu.memory_space<smem>>
    %c1_180 = arith.constant 1 : index
    %c3_181 = arith.constant 3 : index
    %311 = vector.load %arg4[%c1_180, %c3_181] : memref<2x358xf32, #tpu.memory_space<vmem>>, vector<1x256xf32>
    %312 = vector.broadcast %310 : f32 to vector<1x256xf32>
    %313 = arith.mulf %312, %311 : vector<1x256xf32>
    %314 = arith.addf %309, %313 : vector<1x256xf32>
    %c1_182 = arith.constant 1 : index
    %c10_183 = arith.constant 10 : index
    %315 = memref.load %arg1[%c1_182, %c10_183] : memref<2x49xf32, #tpu.memory_space<smem>>
    %c1_184 = arith.constant 1 : index
    %c19_185 = arith.constant 19 : index
    %316 = vector.load %arg4[%c1_184, %c19_185] : memref<2x358xf32, #tpu.memory_space<vmem>>, vector<1x256xf32>
    %317 = vector.broadcast %315 : f32 to vector<1x256xf32>
    %318 = arith.mulf %317, %316 : vector<1x256xf32>
    %319 = arith.addf %314, %318 : vector<1x256xf32>
    %c1_186 = arith.constant 1 : index
    %c17_187 = arith.constant 17 : index
    %320 = memref.load %arg1[%c1_186, %c17_187] : memref<2x49xf32, #tpu.memory_space<smem>>
    %c1_188 = arith.constant 1 : index
    %c35_189 = arith.constant 35 : index
    %321 = vector.load %arg4[%c1_188, %c35_189] : memref<2x358xf32, #tpu.memory_space<vmem>>, vector<1x256xf32>
    %322 = vector.broadcast %320 : f32 to vector<1x256xf32>
    %323 = arith.mulf %322, %321 : vector<1x256xf32>
    %324 = arith.addf %319, %323 : vector<1x256xf32>
    %c1_190 = arith.constant 1 : index
    %c24_191 = arith.constant 24 : index
    %325 = memref.load %arg1[%c1_190, %c24_191] : memref<2x49xf32, #tpu.memory_space<smem>>
    %c1_192 = arith.constant 1 : index
    %c51_193 = arith.constant 51 : index
    %326 = vector.load %arg4[%c1_192, %c51_193] : memref<2x358xf32, #tpu.memory_space<vmem>>, vector<1x256xf32>
    %327 = vector.broadcast %325 : f32 to vector<1x256xf32>
    %328 = arith.mulf %327, %326 : vector<1x256xf32>
    %329 = arith.addf %324, %328 : vector<1x256xf32>
    %c1_194 = arith.constant 1 : index
    %c31_195 = arith.constant 31 : index
    %330 = memref.load %arg1[%c1_194, %c31_195] : memref<2x49xf32, #tpu.memory_space<smem>>
    %c1_196 = arith.constant 1 : index
    %c67_197 = arith.constant 67 : index
    %331 = vector.load %arg4[%c1_196, %c67_197] : memref<2x358xf32, #tpu.memory_space<vmem>>, vector<1x256xf32>
    %332 = vector.broadcast %330 : f32 to vector<1x256xf32>
    %333 = arith.mulf %332, %331 : vector<1x256xf32>
    %334 = arith.addf %329, %333 : vector<1x256xf32>
    %c1_198 = arith.constant 1 : index
    %c38_199 = arith.constant 38 : index
    %335 = memref.load %arg1[%c1_198, %c38_199] : memref<2x49xf32, #tpu.memory_space<smem>>
    %c1_200 = arith.constant 1 : index
    %c83_201 = arith.constant 83 : index
    %336 = vector.load %arg4[%c1_200, %c83_201] : memref<2x358xf32, #tpu.memory_space<vmem>>, vector<1x256xf32>
    %337 = vector.broadcast %335 : f32 to vector<1x256xf32>
    %338 = arith.mulf %337, %336 : vector<1x256xf32>
    %339 = arith.addf %334, %338 : vector<1x256xf32>
    %c1_202 = arith.constant 1 : index
    %c45_203 = arith.constant 45 : index
    %340 = memref.load %arg1[%c1_202, %c45_203] : memref<2x49xf32, #tpu.memory_space<smem>>
    %c1_204 = arith.constant 1 : index
    %c99_205 = arith.constant 99 : index
    %341 = vector.load %arg4[%c1_204, %c99_205] : memref<2x358xf32, #tpu.memory_space<vmem>>, vector<1x256xf32>
    %342 = vector.broadcast %340 : f32 to vector<1x256xf32>
    %343 = arith.mulf %342, %341 : vector<1x256xf32>
    %344 = arith.addf %339, %343 : vector<1x256xf32>
    %345 = arith.addf %273, %344 : vector<1x256xf32>
    %cst_206 = arith.constant 0.000000e+00 : f32
    %346 = vector.broadcast %cst_206 : f32 to vector<1x256xf32>
    %c0_207 = arith.constant 0 : index
    %c4 = arith.constant 4 : index
    %347 = memref.load %arg1[%c0_207, %c4] : memref<2x49xf32, #tpu.memory_space<smem>>
    %c0_208 = arith.constant 0 : index
    %c4_209 = arith.constant 4 : index
    %348 = vector.load %arg4[%c0_208, %c4_209] : memref<2x358xf32, #tpu.memory_space<vmem>>, vector<1x256xf32>
    %349 = vector.broadcast %347 : f32 to vector<1x256xf32>
    %350 = arith.mulf %349, %348 : vector<1x256xf32>
    %351 = arith.addf %346, %350 : vector<1x256xf32>
    %c0_210 = arith.constant 0 : index
    %c11 = arith.constant 11 : index
    %352 = memref.load %arg1[%c0_210, %c11] : memref<2x49xf32, #tpu.memory_space<smem>>
    %c0_211 = arith.constant 0 : index
    %c20 = arith.constant 20 : index
    %353 = vector.load %arg4[%c0_211, %c20] : memref<2x358xf32, #tpu.memory_space<vmem>>, vector<1x256xf32>
    %354 = vector.broadcast %352 : f32 to vector<1x256xf32>
    %355 = arith.mulf %354, %353 : vector<1x256xf32>
    %356 = arith.addf %351, %355 : vector<1x256xf32>
    %c0_212 = arith.constant 0 : index
    %c18_213 = arith.constant 18 : index
    %357 = memref.load %arg1[%c0_212, %c18_213] : memref<2x49xf32, #tpu.memory_space<smem>>
    %c0_214 = arith.constant 0 : index
    %c36_215 = arith.constant 36 : index
    %358 = vector.load %arg4[%c0_214, %c36_215] : memref<2x358xf32, #tpu.memory_space<vmem>>, vector<1x256xf32>
    %359 = vector.broadcast %357 : f32 to vector<1x256xf32>
    %360 = arith.mulf %359, %358 : vector<1x256xf32>
    %361 = arith.addf %356, %360 : vector<1x256xf32>
    %c0_216 = arith.constant 0 : index
    %c25 = arith.constant 25 : index
    %362 = memref.load %arg1[%c0_216, %c25] : memref<2x49xf32, #tpu.memory_space<smem>>
    %c0_217 = arith.constant 0 : index
    %c52 = arith.constant 52 : index
    %363 = vector.load %arg4[%c0_217, %c52] : memref<2x358xf32, #tpu.memory_space<vmem>>, vector<1x256xf32>
    %364 = vector.broadcast %362 : f32 to vector<1x256xf32>
    %365 = arith.mulf %364, %363 : vector<1x256xf32>
    %366 = arith.addf %361, %365 : vector<1x256xf32>
    %c0_218 = arith.constant 0 : index
    %c32_219 = arith.constant 32 : index
    %367 = memref.load %arg1[%c0_218, %c32_219] : memref<2x49xf32, #tpu.memory_space<smem>>
    %c0_220 = arith.constant 0 : index
    %c68 = arith.constant 68 : index
    %368 = vector.load %arg4[%c0_220, %c68] : memref<2x358xf32, #tpu.memory_space<vmem>>, vector<1x256xf32>
    %369 = vector.broadcast %367 : f32 to vector<1x256xf32>
    %370 = arith.mulf %369, %368 : vector<1x256xf32>
    %371 = arith.addf %366, %370 : vector<1x256xf32>
    %c0_221 = arith.constant 0 : index
    %c39 = arith.constant 39 : index
    %372 = memref.load %arg1[%c0_221, %c39] : memref<2x49xf32, #tpu.memory_space<smem>>
    %c0_222 = arith.constant 0 : index
    %c84 = arith.constant 84 : index
    %373 = vector.load %arg4[%c0_222, %c84] : memref<2x358xf32, #tpu.memory_space<vmem>>, vector<1x256xf32>
    %374 = vector.broadcast %372 : f32 to vector<1x256xf32>
    %375 = arith.mulf %374, %373 : vector<1x256xf32>
    %376 = arith.addf %371, %375 : vector<1x256xf32>
    %c0_223 = arith.constant 0 : index
    %c46 = arith.constant 46 : index
    %377 = memref.load %arg1[%c0_223, %c46] : memref<2x49xf32, #tpu.memory_space<smem>>
    %c0_224 = arith.constant 0 : index
    %c100 = arith.constant 100 : index
    %378 = vector.load %arg4[%c0_224, %c100] : memref<2x358xf32, #tpu.memory_space<vmem>>, vector<1x256xf32>
    %379 = vector.broadcast %377 : f32 to vector<1x256xf32>
    %380 = arith.mulf %379, %378 : vector<1x256xf32>
    %381 = arith.addf %376, %380 : vector<1x256xf32>
    %c1_225 = arith.constant 1 : index
    %c4_226 = arith.constant 4 : index
    %382 = memref.load %arg1[%c1_225, %c4_226] : memref<2x49xf32, #tpu.memory_space<smem>>
    %c1_227 = arith.constant 1 : index
    %c4_228 = arith.constant 4 : index
    %383 = vector.load %arg4[%c1_227, %c4_228] : memref<2x358xf32, #tpu.memory_space<vmem>>, vector<1x256xf32>
    %384 = vector.broadcast %382 : f32 to vector<1x256xf32>
    %385 = arith.mulf %384, %383 : vector<1x256xf32>
    %386 = arith.addf %381, %385 : vector<1x256xf32>
    %c1_229 = arith.constant 1 : index
    %c11_230 = arith.constant 11 : index
    %387 = memref.load %arg1[%c1_229, %c11_230] : memref<2x49xf32, #tpu.memory_space<smem>>
    %c1_231 = arith.constant 1 : index
    %c20_232 = arith.constant 20 : index
    %388 = vector.load %arg4[%c1_231, %c20_232] : memref<2x358xf32, #tpu.memory_space<vmem>>, vector<1x256xf32>
    %389 = vector.broadcast %387 : f32 to vector<1x256xf32>
    %390 = arith.mulf %389, %388 : vector<1x256xf32>
    %391 = arith.addf %386, %390 : vector<1x256xf32>
    %c1_233 = arith.constant 1 : index
    %c18_234 = arith.constant 18 : index
    %392 = memref.load %arg1[%c1_233, %c18_234] : memref<2x49xf32, #tpu.memory_space<smem>>
    %c1_235 = arith.constant 1 : index
    %c36_236 = arith.constant 36 : index
    %393 = vector.load %arg4[%c1_235, %c36_236] : memref<2x358xf32, #tpu.memory_space<vmem>>, vector<1x256xf32>
    %394 = vector.broadcast %392 : f32 to vector<1x256xf32>
    %395 = arith.mulf %394, %393 : vector<1x256xf32>
    %396 = arith.addf %391, %395 : vector<1x256xf32>
    %c1_237 = arith.constant 1 : index
    %c25_238 = arith.constant 25 : index
    %397 = memref.load %arg1[%c1_237, %c25_238] : memref<2x49xf32, #tpu.memory_space<smem>>
    %c1_239 = arith.constant 1 : index
    %c52_240 = arith.constant 52 : index
    %398 = vector.load %arg4[%c1_239, %c52_240] : memref<2x358xf32, #tpu.memory_space<vmem>>, vector<1x256xf32>
    %399 = vector.broadcast %397 : f32 to vector<1x256xf32>
    %400 = arith.mulf %399, %398 : vector<1x256xf32>
    %401 = arith.addf %396, %400 : vector<1x256xf32>
    %c1_241 = arith.constant 1 : index
    %c32_242 = arith.constant 32 : index
    %402 = memref.load %arg1[%c1_241, %c32_242] : memref<2x49xf32, #tpu.memory_space<smem>>
    %c1_243 = arith.constant 1 : index
    %c68_244 = arith.constant 68 : index
    %403 = vector.load %arg4[%c1_243, %c68_244] : memref<2x358xf32, #tpu.memory_space<vmem>>, vector<1x256xf32>
    %404 = vector.broadcast %402 : f32 to vector<1x256xf32>
    %405 = arith.mulf %404, %403 : vector<1x256xf32>
    %406 = arith.addf %401, %405 : vector<1x256xf32>
    %c1_245 = arith.constant 1 : index
    %c39_246 = arith.constant 39 : index
    %407 = memref.load %arg1[%c1_245, %c39_246] : memref<2x49xf32, #tpu.memory_space<smem>>
    %c1_247 = arith.constant 1 : index
    %c84_248 = arith.constant 84 : index
    %408 = vector.load %arg4[%c1_247, %c84_248] : memref<2x358xf32, #tpu.memory_space<vmem>>, vector<1x256xf32>
    %409 = vector.broadcast %407 : f32 to vector<1x256xf32>
    %410 = arith.mulf %409, %408 : vector<1x256xf32>
    %411 = arith.addf %406, %410 : vector<1x256xf32>
    %c1_249 = arith.constant 1 : index
    %c46_250 = arith.constant 46 : index
    %412 = memref.load %arg1[%c1_249, %c46_250] : memref<2x49xf32, #tpu.memory_space<smem>>
    %c1_251 = arith.constant 1 : index
    %c100_252 = arith.constant 100 : index
    %413 = vector.load %arg4[%c1_251, %c100_252] : memref<2x358xf32, #tpu.memory_space<vmem>>, vector<1x256xf32>
    %414 = vector.broadcast %412 : f32 to vector<1x256xf32>
    %415 = arith.mulf %414, %413 : vector<1x256xf32>
    %416 = arith.addf %411, %415 : vector<1x256xf32>
    %c-1_i32 = arith.constant -1 : i32
    %417 = vector.broadcast %c-1_i32 : i32 to vector<1x256xi32>
    %418 = arith.cmpi sge, %6, %417 : vector<1x256xi32>
    %c14_i32 = arith.constant 14 : i32
    %419 = vector.broadcast %c14_i32 : i32 to vector<1x256xi32>
    %420 = arith.cmpi sle, %6, %419 : vector<1x256xi32>
    %421 = arith.andi %418, %420 : vector<1x256xi1>
    %cst_253 = arith.constant 1.000000e+00 : f32
    %cst_254 = arith.constant 0.000000e+00 : f32
    %422 = vector.broadcast %cst_253 : f32 to vector<1x256xf32>
    %423 = vector.broadcast %cst_254 : f32 to vector<1x256xf32>
    %424 = arith.select %421, %422, %423 : vector<1x256xi1>, vector<1x256xf32>
    %425 = arith.mulf %424, %416 : vector<1x256xf32>
    %426 = arith.addf %345, %425 : vector<1x256xf32>
    %cst_255 = arith.constant 0.000000e+00 : f32
    %427 = vector.broadcast %cst_255 : f32 to vector<1x256xf32>
    %c0_256 = arith.constant 0 : index
    %c5 = arith.constant 5 : index
    %428 = memref.load %arg1[%c0_256, %c5] : memref<2x49xf32, #tpu.memory_space<smem>>
    %c0_257 = arith.constant 0 : index
    %c5_258 = arith.constant 5 : index
    %429 = vector.load %arg4[%c0_257, %c5_258] : memref<2x358xf32, #tpu.memory_space<vmem>>, vector<1x256xf32>
    %430 = vector.broadcast %428 : f32 to vector<1x256xf32>
    %431 = arith.mulf %430, %429 : vector<1x256xf32>
    %432 = arith.addf %427, %431 : vector<1x256xf32>
    %c0_259 = arith.constant 0 : index
    %c12 = arith.constant 12 : index
    %433 = memref.load %arg1[%c0_259, %c12] : memref<2x49xf32, #tpu.memory_space<smem>>
    %c0_260 = arith.constant 0 : index
    %c21_261 = arith.constant 21 : index
    %434 = vector.load %arg4[%c0_260, %c21_261] : memref<2x358xf32, #tpu.memory_space<vmem>>, vector<1x256xf32>
    %435 = vector.broadcast %433 : f32 to vector<1x256xf32>
    %436 = arith.mulf %435, %434 : vector<1x256xf32>
    %437 = arith.addf %432, %436 : vector<1x256xf32>
    %c0_262 = arith.constant 0 : index
    %c19_263 = arith.constant 19 : index
    %438 = memref.load %arg1[%c0_262, %c19_263] : memref<2x49xf32, #tpu.memory_space<smem>>
    %c0_264 = arith.constant 0 : index
    %c37_265 = arith.constant 37 : index
    %439 = vector.load %arg4[%c0_264, %c37_265] : memref<2x358xf32, #tpu.memory_space<vmem>>, vector<1x256xf32>
    %440 = vector.broadcast %438 : f32 to vector<1x256xf32>
    %441 = arith.mulf %440, %439 : vector<1x256xf32>
    %442 = arith.addf %437, %441 : vector<1x256xf32>
    %c0_266 = arith.constant 0 : index
    %c26 = arith.constant 26 : index
    %443 = memref.load %arg1[%c0_266, %c26] : memref<2x49xf32, #tpu.memory_space<smem>>
    %c0_267 = arith.constant 0 : index
    %c53 = arith.constant 53 : index
    %444 = vector.load %arg4[%c0_267, %c53] : memref<2x358xf32, #tpu.memory_space<vmem>>, vector<1x256xf32>
    %445 = vector.broadcast %443 : f32 to vector<1x256xf32>
    %446 = arith.mulf %445, %444 : vector<1x256xf32>
    %447 = arith.addf %442, %446 : vector<1x256xf32>
    %c0_268 = arith.constant 0 : index
    %c33_269 = arith.constant 33 : index
    %448 = memref.load %arg1[%c0_268, %c33_269] : memref<2x49xf32, #tpu.memory_space<smem>>
    %c0_270 = arith.constant 0 : index
    %c69 = arith.constant 69 : index
    %449 = vector.load %arg4[%c0_270, %c69] : memref<2x358xf32, #tpu.memory_space<vmem>>, vector<1x256xf32>
    %450 = vector.broadcast %448 : f32 to vector<1x256xf32>
    %451 = arith.mulf %450, %449 : vector<1x256xf32>
    %452 = arith.addf %447, %451 : vector<1x256xf32>
    %c0_271 = arith.constant 0 : index
    %c40 = arith.constant 40 : index
    %453 = memref.load %arg1[%c0_271, %c40] : memref<2x49xf32, #tpu.memory_space<smem>>
    %c0_272 = arith.constant 0 : index
    %c85 = arith.constant 85 : index
    %454 = vector.load %arg4[%c0_272, %c85] : memref<2x358xf32, #tpu.memory_space<vmem>>, vector<1x256xf32>
    %455 = vector.broadcast %453 : f32 to vector<1x256xf32>
    %456 = arith.mulf %455, %454 : vector<1x256xf32>
    %457 = arith.addf %452, %456 : vector<1x256xf32>
    %c0_273 = arith.constant 0 : index
    %c47 = arith.constant 47 : index
    %458 = memref.load %arg1[%c0_273, %c47] : memref<2x49xf32, #tpu.memory_space<smem>>
    %c0_274 = arith.constant 0 : index
    %c101 = arith.constant 101 : index
    %459 = vector.load %arg4[%c0_274, %c101] : memref<2x358xf32, #tpu.memory_space<vmem>>, vector<1x256xf32>
    %460 = vector.broadcast %458 : f32 to vector<1x256xf32>
    %461 = arith.mulf %460, %459 : vector<1x256xf32>
    %462 = arith.addf %457, %461 : vector<1x256xf32>
    %c1_275 = arith.constant 1 : index
    %c5_276 = arith.constant 5 : index
    %463 = memref.load %arg1[%c1_275, %c5_276] : memref<2x49xf32, #tpu.memory_space<smem>>
    %c1_277 = arith.constant 1 : index
    %c5_278 = arith.constant 5 : index
    %464 = vector.load %arg4[%c1_277, %c5_278] : memref<2x358xf32, #tpu.memory_space<vmem>>, vector<1x256xf32>
    %465 = vector.broadcast %463 : f32 to vector<1x256xf32>
    %466 = arith.mulf %465, %464 : vector<1x256xf32>
    %467 = arith.addf %462, %466 : vector<1x256xf32>
    %c1_279 = arith.constant 1 : index
    %c12_280 = arith.constant 12 : index
    %468 = memref.load %arg1[%c1_279, %c12_280] : memref<2x49xf32, #tpu.memory_space<smem>>
    %c1_281 = arith.constant 1 : index
    %c21_282 = arith.constant 21 : index
    %469 = vector.load %arg4[%c1_281, %c21_282] : memref<2x358xf32, #tpu.memory_space<vmem>>, vector<1x256xf32>
    %470 = vector.broadcast %468 : f32 to vector<1x256xf32>
    %471 = arith.mulf %470, %469 : vector<1x256xf32>
    %472 = arith.addf %467, %471 : vector<1x256xf32>
    %c1_283 = arith.constant 1 : index
    %c19_284 = arith.constant 19 : index
    %473 = memref.load %arg1[%c1_283, %c19_284] : memref<2x49xf32, #tpu.memory_space<smem>>
    %c1_285 = arith.constant 1 : index
    %c37_286 = arith.constant 37 : index
    %474 = vector.load %arg4[%c1_285, %c37_286] : memref<2x358xf32, #tpu.memory_space<vmem>>, vector<1x256xf32>
    %475 = vector.broadcast %473 : f32 to vector<1x256xf32>
    %476 = arith.mulf %475, %474 : vector<1x256xf32>
    %477 = arith.addf %472, %476 : vector<1x256xf32>
    %c1_287 = arith.constant 1 : index
    %c26_288 = arith.constant 26 : index
    %478 = memref.load %arg1[%c1_287, %c26_288] : memref<2x49xf32, #tpu.memory_space<smem>>
    %c1_289 = arith.constant 1 : index
    %c53_290 = arith.constant 53 : index
    %479 = vector.load %arg4[%c1_289, %c53_290] : memref<2x358xf32, #tpu.memory_space<vmem>>, vector<1x256xf32>
    %480 = vector.broadcast %478 : f32 to vector<1x256xf32>
    %481 = arith.mulf %480, %479 : vector<1x256xf32>
    %482 = arith.addf %477, %481 : vector<1x256xf32>
    %c1_291 = arith.constant 1 : index
    %c33_292 = arith.constant 33 : index
    %483 = memref.load %arg1[%c1_291, %c33_292] : memref<2x49xf32, #tpu.memory_space<smem>>
    %c1_293 = arith.constant 1 : index
    %c69_294 = arith.constant 69 : index
    %484 = vector.load %arg4[%c1_293, %c69_294] : memref<2x358xf32, #tpu.memory_space<vmem>>, vector<1x256xf32>
    %485 = vector.broadcast %483 : f32 to vector<1x256xf32>
    %486 = arith.mulf %485, %484 : vector<1x256xf32>
    %487 = arith.addf %482, %486 : vector<1x256xf32>
    %c1_295 = arith.constant 1 : index
    %c40_296 = arith.constant 40 : index
    %488 = memref.load %arg1[%c1_295, %c40_296] : memref<2x49xf32, #tpu.memory_space<smem>>
    %c1_297 = arith.constant 1 : index
    %c85_298 = arith.constant 85 : index
    %489 = vector.load %arg4[%c1_297, %c85_298] : memref<2x358xf32, #tpu.memory_space<vmem>>, vector<1x256xf32>
    %490 = vector.broadcast %488 : f32 to vector<1x256xf32>
    %491 = arith.mulf %490, %489 : vector<1x256xf32>
    %492 = arith.addf %487, %491 : vector<1x256xf32>
    %c1_299 = arith.constant 1 : index
    %c47_300 = arith.constant 47 : index
    %493 = memref.load %arg1[%c1_299, %c47_300] : memref<2x49xf32, #tpu.memory_space<smem>>
    %c1_301 = arith.constant 1 : index
    %c101_302 = arith.constant 101 : index
    %494 = vector.load %arg4[%c1_301, %c101_302] : memref<2x358xf32, #tpu.memory_space<vmem>>, vector<1x256xf32>
    %495 = vector.broadcast %493 : f32 to vector<1x256xf32>
    %496 = arith.mulf %495, %494 : vector<1x256xf32>
    %497 = arith.addf %492, %496 : vector<1x256xf32>
    %c-2_i32 = arith.constant -2 : i32
    %498 = vector.broadcast %c-2_i32 : i32 to vector<1x256xi32>
    %499 = arith.cmpi sge, %6, %498 : vector<1x256xi32>
    %c13_i32 = arith.constant 13 : i32
    %500 = vector.broadcast %c13_i32 : i32 to vector<1x256xi32>
    %501 = arith.cmpi sle, %6, %500 : vector<1x256xi32>
    %502 = arith.andi %499, %501 : vector<1x256xi1>
    %cst_303 = arith.constant 1.000000e+00 : f32
    %cst_304 = arith.constant 0.000000e+00 : f32
    %503 = vector.broadcast %cst_303 : f32 to vector<1x256xf32>
    %504 = vector.broadcast %cst_304 : f32 to vector<1x256xf32>
    %505 = arith.select %502, %503, %504 : vector<1x256xi1>, vector<1x256xf32>
    %506 = arith.mulf %505, %497 : vector<1x256xf32>
    %507 = arith.addf %426, %506 : vector<1x256xf32>
    %cst_305 = arith.constant 0.000000e+00 : f32
    %508 = vector.broadcast %cst_305 : f32 to vector<1x256xf32>
    %c0_306 = arith.constant 0 : index
    %c6 = arith.constant 6 : index
    %509 = memref.load %arg1[%c0_306, %c6] : memref<2x49xf32, #tpu.memory_space<smem>>
    %c0_307 = arith.constant 0 : index
    %c6_308 = arith.constant 6 : index
    %510 = vector.load %arg4[%c0_307, %c6_308] : memref<2x358xf32, #tpu.memory_space<vmem>>, vector<1x256xf32>
    %511 = vector.broadcast %509 : f32 to vector<1x256xf32>
    %512 = arith.mulf %511, %510 : vector<1x256xf32>
    %513 = arith.addf %508, %512 : vector<1x256xf32>
    %c0_309 = arith.constant 0 : index
    %c13 = arith.constant 13 : index
    %514 = memref.load %arg1[%c0_309, %c13] : memref<2x49xf32, #tpu.memory_space<smem>>
    %c0_310 = arith.constant 0 : index
    %c22_311 = arith.constant 22 : index
    %515 = vector.load %arg4[%c0_310, %c22_311] : memref<2x358xf32, #tpu.memory_space<vmem>>, vector<1x256xf32>
    %516 = vector.broadcast %514 : f32 to vector<1x256xf32>
    %517 = arith.mulf %516, %515 : vector<1x256xf32>
    %518 = arith.addf %513, %517 : vector<1x256xf32>
    %c0_312 = arith.constant 0 : index
    %c20_313 = arith.constant 20 : index
    %519 = memref.load %arg1[%c0_312, %c20_313] : memref<2x49xf32, #tpu.memory_space<smem>>
    %c0_314 = arith.constant 0 : index
    %c38_315 = arith.constant 38 : index
    %520 = vector.load %arg4[%c0_314, %c38_315] : memref<2x358xf32, #tpu.memory_space<vmem>>, vector<1x256xf32>
    %521 = vector.broadcast %519 : f32 to vector<1x256xf32>
    %522 = arith.mulf %521, %520 : vector<1x256xf32>
    %523 = arith.addf %518, %522 : vector<1x256xf32>
    %c0_316 = arith.constant 0 : index
    %c27 = arith.constant 27 : index
    %524 = memref.load %arg1[%c0_316, %c27] : memref<2x49xf32, #tpu.memory_space<smem>>
    %c0_317 = arith.constant 0 : index
    %c54 = arith.constant 54 : index
    %525 = vector.load %arg4[%c0_317, %c54] : memref<2x358xf32, #tpu.memory_space<vmem>>, vector<1x256xf32>
    %526 = vector.broadcast %524 : f32 to vector<1x256xf32>
    %527 = arith.mulf %526, %525 : vector<1x256xf32>
    %528 = arith.addf %523, %527 : vector<1x256xf32>
    %c0_318 = arith.constant 0 : index
    %c34_319 = arith.constant 34 : index
    %529 = memref.load %arg1[%c0_318, %c34_319] : memref<2x49xf32, #tpu.memory_space<smem>>
    %c0_320 = arith.constant 0 : index
    %c70 = arith.constant 70 : index
    %530 = vector.load %arg4[%c0_320, %c70] : memref<2x358xf32, #tpu.memory_space<vmem>>, vector<1x256xf32>
    %531 = vector.broadcast %529 : f32 to vector<1x256xf32>
    %532 = arith.mulf %531, %530 : vector<1x256xf32>
    %533 = arith.addf %528, %532 : vector<1x256xf32>
    %c0_321 = arith.constant 0 : index
    %c41 = arith.constant 41 : index
    %534 = memref.load %arg1[%c0_321, %c41] : memref<2x49xf32, #tpu.memory_space<smem>>
    %c0_322 = arith.constant 0 : index
    %c86 = arith.constant 86 : index
    %535 = vector.load %arg4[%c0_322, %c86] : memref<2x358xf32, #tpu.memory_space<vmem>>, vector<1x256xf32>
    %536 = vector.broadcast %534 : f32 to vector<1x256xf32>
    %537 = arith.mulf %536, %535 : vector<1x256xf32>
    %538 = arith.addf %533, %537 : vector<1x256xf32>
    %c0_323 = arith.constant 0 : index
    %c48_324 = arith.constant 48 : index
    %539 = memref.load %arg1[%c0_323, %c48_324] : memref<2x49xf32, #tpu.memory_space<smem>>
    %c0_325 = arith.constant 0 : index
    %c102 = arith.constant 102 : index
    %540 = vector.load %arg4[%c0_325, %c102] : memref<2x358xf32, #tpu.memory_space<vmem>>, vector<1x256xf32>
    %541 = vector.broadcast %539 : f32 to vector<1x256xf32>
    %542 = arith.mulf %541, %540 : vector<1x256xf32>
    %543 = arith.addf %538, %542 : vector<1x256xf32>
    %c1_326 = arith.constant 1 : index
    %c6_327 = arith.constant 6 : index
    %544 = memref.load %arg1[%c1_326, %c6_327] : memref<2x49xf32, #tpu.memory_space<smem>>
    %c1_328 = arith.constant 1 : index
    %c6_329 = arith.constant 6 : index
    %545 = vector.load %arg4[%c1_328, %c6_329] : memref<2x358xf32, #tpu.memory_space<vmem>>, vector<1x256xf32>
    %546 = vector.broadcast %544 : f32 to vector<1x256xf32>
    %547 = arith.mulf %546, %545 : vector<1x256xf32>
    %548 = arith.addf %543, %547 : vector<1x256xf32>
    %c1_330 = arith.constant 1 : index
    %c13_331 = arith.constant 13 : index
    %549 = memref.load %arg1[%c1_330, %c13_331] : memref<2x49xf32, #tpu.memory_space<smem>>
    %c1_332 = arith.constant 1 : index
    %c22_333 = arith.constant 22 : index
    %550 = vector.load %arg4[%c1_332, %c22_333] : memref<2x358xf32, #tpu.memory_space<vmem>>, vector<1x256xf32>
    %551 = vector.broadcast %549 : f32 to vector<1x256xf32>
    %552 = arith.mulf %551, %550 : vector<1x256xf32>
    %553 = arith.addf %548, %552 : vector<1x256xf32>
    %c1_334 = arith.constant 1 : index
    %c20_335 = arith.constant 20 : index
    %554 = memref.load %arg1[%c1_334, %c20_335] : memref<2x49xf32, #tpu.memory_space<smem>>
    %c1_336 = arith.constant 1 : index
    %c38_337 = arith.constant 38 : index
    %555 = vector.load %arg4[%c1_336, %c38_337] : memref<2x358xf32, #tpu.memory_space<vmem>>, vector<1x256xf32>
    %556 = vector.broadcast %554 : f32 to vector<1x256xf32>
    %557 = arith.mulf %556, %555 : vector<1x256xf32>
    %558 = arith.addf %553, %557 : vector<1x256xf32>
    %c1_338 = arith.constant 1 : index
    %c27_339 = arith.constant 27 : index
    %559 = memref.load %arg1[%c1_338, %c27_339] : memref<2x49xf32, #tpu.memory_space<smem>>
    %c1_340 = arith.constant 1 : index
    %c54_341 = arith.constant 54 : index
    %560 = vector.load %arg4[%c1_340, %c54_341] : memref<2x358xf32, #tpu.memory_space<vmem>>, vector<1x256xf32>
    %561 = vector.broadcast %559 : f32 to vector<1x256xf32>
    %562 = arith.mulf %561, %560 : vector<1x256xf32>
    %563 = arith.addf %558, %562 : vector<1x256xf32>
    %c1_342 = arith.constant 1 : index
    %c34_343 = arith.constant 34 : index
    %564 = memref.load %arg1[%c1_342, %c34_343] : memref<2x49xf32, #tpu.memory_space<smem>>
    %c1_344 = arith.constant 1 : index
    %c70_345 = arith.constant 70 : index
    %565 = vector.load %arg4[%c1_344, %c70_345] : memref<2x358xf32, #tpu.memory_space<vmem>>, vector<1x256xf32>
    %566 = vector.broadcast %564 : f32 to vector<1x256xf32>
    %567 = arith.mulf %566, %565 : vector<1x256xf32>
    %568 = arith.addf %563, %567 : vector<1x256xf32>
    %c1_346 = arith.constant 1 : index
    %c41_347 = arith.constant 41 : index
    %569 = memref.load %arg1[%c1_346, %c41_347] : memref<2x49xf32, #tpu.memory_space<smem>>
    %c1_348 = arith.constant 1 : index
    %c86_349 = arith.constant 86 : index
    %570 = vector.load %arg4[%c1_348, %c86_349] : memref<2x358xf32, #tpu.memory_space<vmem>>, vector<1x256xf32>
    %571 = vector.broadcast %569 : f32 to vector<1x256xf32>
    %572 = arith.mulf %571, %570 : vector<1x256xf32>
    %573 = arith.addf %568, %572 : vector<1x256xf32>
    %c1_350 = arith.constant 1 : index
    %c48_351 = arith.constant 48 : index
    %574 = memref.load %arg1[%c1_350, %c48_351] : memref<2x49xf32, #tpu.memory_space<smem>>
    %c1_352 = arith.constant 1 : index
    %c102_353 = arith.constant 102 : index
    %575 = vector.load %arg4[%c1_352, %c102_353] : memref<2x358xf32, #tpu.memory_space<vmem>>, vector<1x256xf32>
    %576 = vector.broadcast %574 : f32 to vector<1x256xf32>
    %577 = arith.mulf %576, %575 : vector<1x256xf32>
    %578 = arith.addf %573, %577 : vector<1x256xf32>
    %c-3_i32 = arith.constant -3 : i32
    %579 = vector.broadcast %c-3_i32 : i32 to vector<1x256xi32>
    %580 = arith.cmpi sge, %6, %579 : vector<1x256xi32>
    %c12_i32 = arith.constant 12 : i32
    %581 = vector.broadcast %c12_i32 : i32 to vector<1x256xi32>
    %582 = arith.cmpi sle, %6, %581 : vector<1x256xi32>
    %583 = arith.andi %580, %582 : vector<1x256xi1>
    %cst_354 = arith.constant 1.000000e+00 : f32
    %cst_355 = arith.constant 0.000000e+00 : f32
    %584 = vector.broadcast %cst_354 : f32 to vector<1x256xf32>
    %585 = vector.broadcast %cst_355 : f32 to vector<1x256xf32>
    %586 = arith.select %583, %584, %585 : vector<1x256xi1>, vector<1x256xf32>
    %587 = arith.mulf %586, %578 : vector<1x256xf32>
    %588 = arith.addf %507, %587 : vector<1x256xf32>
    %589 = arith.negf %588 : vector<1x256xf32>
    %590 = math.exp %589 : vector<1x256xf32>
    %cst_356 = arith.constant 1.000000e+00 : f32
    %591 = vector.broadcast %cst_356 : f32 to vector<1x256xf32>
    %592 = arith.addf %591, %590 : vector<1x256xf32>
    %593 = arith.divf %591, %592 : vector<1x256xf32>
    %c0_i32_357 = arith.constant 0 : i32
    %594 = arith.addi %10, %c0_i32_357 : i32
    %595 = vector.shape_cast %593 : vector<1x256xf32> to vector<1x256xf32>
    %596 = vector.broadcast %595 : vector<1x256xf32> to vector<4x256xf32>
    %c0_i32_358 = arith.constant 0 : i32
    %c4_i32_359 = arith.constant 4 : i32
    %597 = arith.muli %c0_i32_358, %c4_i32_359 : i32
    %598 = tpu.assume_multiple %597, 4 : i32
    %599 = arith.index_cast %594 : i32 to index
    %600 = arith.index_cast %598 : i32 to index
    %c0_360 = arith.constant 0 : index
    %601 = vector.load %arg2[%599, %600, %c0_360] : memref<1x4x256xf32, #tpu.memory_space<vmem>>, vector<1x4x256xf32>
    %602 = vector.shape_cast %601 : vector<1x4x256xf32> to vector<4x256xf32>
    %603 = arith.mulf %602, %596 : vector<4x256xf32>
    %604 = arith.index_cast %594 : i32 to index
    %605 = arith.index_cast %598 : i32 to index
    %c0_361 = arith.constant 0 : index
    %606 = vector.load %arg3[%604, %605, %c0_361] : memref<1x4x256xf32, #tpu.memory_space<vmem>>, vector<1x4x256xf32>
    %607 = vector.shape_cast %606 : vector<1x4x256xf32> to vector<4x256xf32>
    %608 = vector.shape_cast %603 : vector<4x256xf32> to vector<1x4x256xf32>
    tpu.vector_store %arg3[%604, %605, %c0_361], %608 {strides = array<i32>} : memref<1x4x256xf32, #tpu.memory_space<vmem>>, vector<1x4x256xf32>,
    %c1_i32_362 = arith.constant 1 : i32
    %c1_i32_363 = arith.constant 1 : i32
    return
  }
  func.func @transform_0(%arg0: i32) -> (i32, i32) {
    %c0_i32 = arith.constant 0 : i32
    %c0_i32_0 = arith.constant 0 : i32
    %c0_i32_1 = arith.constant 0 : i32
    return %c0_i32, %c0_i32_0 : i32, i32
  }
  func.func @transform_1(%arg0: i32) -> (i32, i32, i32) {
    %c0_i32 = arith.constant 0 : i32
    %c0_i32_0 = arith.constant 0 : i32
    %c0_i32_1 = arith.constant 0 : i32
    return %arg0, %c0_i32, %c0_i32_0 : i32, i32, i32
  }
  func.func @transform_2(%arg0: i32) -> (i32, i32, i32) {
    %c0_i32 = arith.constant 0 : i32
    %c0_i32_0 = arith.constant 0 : i32
    %c0_i32_1 = arith.constant 0 : i32
    return %arg0, %c0_i32, %c0_i32_0 : i32, i32, i32
  }
}

</mosaic_0001>

<llo_original>
// kernel: tpu_custom_call.1
$region0: #{tpu_custom_call.1}
  #allocation0 [shape = 'u32[]', space=smem, size = 0x4, offset = 0x4, fixed_abs, tag = 'smem constant byte address 0x4 - core index']
  #allocation1 [shape = 'u32[144,128]{1,0:T(1,128)}', space=vmem, size = 0x12000, scoped, tag = 'internal scratch']
  #allocation2 [shape = 'f32[2,358]{1,0:T(2,128)}', space=vmem, size = 0xc00, scoped, tag = 'scratch operand']
  %s0 = inlined_call_operand.vmem [shape: f32[2,49], index: 0, kind: input, shape index: {}]
  %s1 = inlined_call_operand.hbm [shape: f32[2,4,256], index: 1, kind: input, shape index: {}, may-alias: {1,2}]
  %s2 = inlined_call_operand.hbm [shape: f32[2,4,256], index: 2, kind: output, shape index: {}, may-alias: {1,2}]
  %s3 = sld [smem:[#allocation0]]
  $region49: #{tpu_custom_call.1} parent=0
    _
  %s5 = ssub.s32 1, %s3
  %s6 = scalar_select 0, %s5, %s3
  $region1: #{tpu_custom_call.1} parent=0
    #allocation3 [shape = 'u8[1024]{0}', space=smem, size = 0x400, scoped, tag = 'input window, operand 0, single buffered']
    #allocation4 [shape = 's32[2]{0}', space=sflag, size = 0x8, scoped, tag = 'scoped memory for tpu_custom_call.1']
    #allocation5 [shape = 's32[2]{0}', space=sflag, size = 0x8, scoped, tag = 'scoped memory for tpu_custom_call.1']
    #allocation6 [shape = 's32[2]{0}', space=sflag, size = 0x8, scoped, tag = 'scoped memory for tpu_custom_call.1']
    #allocation7 [shape = 'u8[8192]{0}', space=vmem, size = 0x2000, scoped, tag = 'input window, operand 1']
    #allocation8 [shape = 'u8[8192]{0}', space=vmem, size = 0x2000, scoped, tag = 'output window, operand 0']
    %7 = vsyncpa [#allocation6], 0
    %8 = vsyncpa [#allocation4], 0
    %s9 = scalar_lea.sflag [#allocation4], 1
    %10 = vsyncpa %s9, 0
    %11 = vsyncpa [#allocation5], 0
    %s12 = scalar_lea.sflag [#allocation5], 1
    %13 = vsyncpa %s12, 0
    loop: start=0, step=1, limit=4
    $region2: #{tpu_custom_call.1} parent=1 // loop_pre_header
      _
    $region3: #{tpu_custom_call.1} parent=1 // loop_header
      %s15 = sphi 0, %s19
      %p16 = scmp.ge.s32.totalorder %s15, 4
      %s23 = sphi 0, %s23
      %s25 = sphi 0, %s23
      %s26 = sphi 0, %s25
      %s40 = sphi 0, %s26
      %s46 = sphi 0, %s48
      %s49 = sphi 0, %s46
      %s50 = sphi 0, %s49
      %s66 = sphi 0, %s50
      %s72 = sphi 0, %s74
      %s75 = sphi 0, %s72
      %s76 = sphi 0, %s75
      %s92 = sphi 0, %s76
    $region4: #{tpu_custom_call.1} parent=1 // loop_header_branch
      %18 = sbr.rel (%p16) target = $region8
    $region5: #{tpu_custom_call.1} parent=1 // loop_body
      %s20 = ssub.s32 %s15, 1
      %s21 = ssub.s32 %s15, 2
      %s22 = sadd.s32 %s15, 1
      %s24 = sadd.s32 %s23, 1
      %p27 = scmp.eq.s32.totalorder %s15, 1
      %p28 = scmp.ne.s32.totalorder %s23, %s25
      %p29 = scmp.eq.s32.totalorder %s15, 0
      %p30 = por %p28, %p29
      %p31 = scmp.ne.s32.totalorder %s23, %s25
      %p32 = scmp.eq.s32.totalorder %s20, 1
      %p33 = por %p31, %p32
      %p34 = scmp.ne.s32.totalorder %s25, %s26
      %p35 = scmp.eq.s32.totalorder %s20, 0
      %p36 = por %p34, %p35
      %p37 = scmp.ne.s32.totalorder %s25, %s26
      %p38 = scmp.eq.s32.totalorder %s21, 1
      %p39 = por %p37, %p38
      %p41 = scmp.ne.s32.totalorder %s26, %s40
      %p42 = scmp.eq.s32.totalorder %s21, 0
      %p43 = por %p41, %p42
      %s44 = ssub.s32 %s15, %s22
      %p45 = scmp.eq.s32.totalorder %s44, 0
      %s47 = sadd.s32 %s46, 1
      %s48 = scalar_select %p45, %s46, %s47
      %p51 = pneg %p45
      %p52 = scmp.eq.s32.totalorder %s15, 1
      %p53 = por %p51, %p52
      %p54 = scmp.ne.s32.totalorder %s46, %s49
      %p55 = scmp.eq.s32.totalorder %s15, 0
      %p56 = por %p54, %p55
      %p57 = scmp.ne.s32.totalorder %s46, %s49
      %p58 = scmp.eq.s32.totalorder %s20, 1
      %p59 = por %p57, %p58
      %p60 = scmp.ne.s32.totalorder %s49, %s50
      %p61 = scmp.eq.s32.totalorder %s20, 0
      %p62 = por %p60, %p61
      %p63 = scmp.ne.s32.totalorder %s49, %s50
      %p64 = scmp.eq.s32.totalorder %s21, 1
      %p65 = por %p63, %p64
      %p67 = scmp.ne.s32.totalorder %s50, %s66
      %p68 = scmp.eq.s32.totalorder %s21, 0
      %p69 = por %p67, %p68
      %s70 = ssub.s32 %s15, %s22
      %p71 = scmp.eq.s32.totalorder %s70, 0
      %s73 = sadd.s32 %s72, 1
      %s74 = scalar_select %p71, %s72, %s73
      %p77 = pneg %p71
      %p78 = scmp.eq.s32.totalorder %s15, 1
      %p79 = por %p77, %p78
      %p80 = scmp.ne.s32.totalorder %s72, %s75
      %p81 = scmp.eq.s32.totalorder %s15, 0
      %p82 = por %p80, %p81
      %p83 = scmp.ne.s32.totalorder %s72, %s75
      %p84 = scmp.eq.s32.totalorder %s20, 1
      %p85 = por %p83, %p84
      %p86 = scmp.ne.s32.totalorder %s75, %s76
      %p87 = scmp.eq.s32.totalorder %s20, 0
      %p88 = por %p86, %p87
      %p89 = scmp.ne.s32.totalorder %s75, %s76
      %p90 = scmp.eq.s32.totalorder %s21, 1
      %p91 = por %p89, %p90
      %p93 = scmp.ne.s32.totalorder %s76, %s92
      %p94 = scmp.eq.s32.totalorder %s21, 0
      %p95 = por %p93, %p94
      %p96 = scmp.le.s32.totalorder 1, %s15
      %p97 = scmp.lt.s32.totalorder %s15, 3
      %p98 = pnand %p96, %p97
      %p99 = pneg %p98
      // Predicated region
      $region9: #{tpu_custom_call.1} parent=5 // pred_check
        _
      $region10: #{tpu_custom_call.1} parent=5 // pred_check_branch
        %101 = sbr.rel (%p98) target = $region12
      $region11: #{tpu_custom_call.1} parent=5 // pred_region
        %s102 = ssub.s32 %s15, 1
        // Predicated region
        $region13: #{tpu_custom_call.1} parent=11 // pred_check
          %p103 = pneg %p36
        $region14: #{tpu_custom_call.1} parent=11 // pred_check_branch
          %105 = sbr.rel (%p103) target = $region16
        $region15: #{tpu_custom_call.1} parent=11 // pred_region
          %s107 = ssub.s32 32, 32
          %108 = vsyncadd [#allocation6], %s107
          %s110 = sshll.u32 %s0, 4
          %s111 = int_to_ptr.vmem [resolvable:$true] %s110
          %113 = dma.vmem_to_smem %s111, 32, [#allocation3], [#allocation6]
        $region16: #{tpu_custom_call.1} parent=11 // pred_fallthru
          _
      $region12: #{tpu_custom_call.1} parent=5 // pred_fallthru
        _
      %p114 = scmp.lt.s32.totalorder %s15, 2
      // Predicated region
      $region17: #{tpu_custom_call.1} parent=5 // pred_check
        %p115 = pneg %p114
      $region18: #{tpu_custom_call.1} parent=5 // pred_check_branch
        %117 = sbr.rel (%p115) target = $region20
      $region19: #{tpu_custom_call.1} parent=5 // pred_region
        // Predicated region
        $region21: #{tpu_custom_call.1} parent=19 // pred_check
          %p118 = pneg %p56
        $region22: #{tpu_custom_call.1} parent=19 // pred_check_branch
          %120 = sbr.rel (%p118) target = $region24
        $region23: #{tpu_custom_call.1} parent=19 // pred_region
          %s121 = sand.u32 %s46, 1
          %s122 = scalar_lea.sflag [#allocation4], %s121
          %s123 = sand.u32 %s46, 1
          %s124 = smul.addr %s123, 8
          %s125 = scalar_lea.vmem [#allocation7], %s124
          %s127 = ssub.s32 128, 128
          %128 = vsyncadd %s122, %s127
          %s129 = smul.addr %s15, 2
          %s130 = smul.addr %s129, 64
          %s131 = scalar_lea.hbm %s1, %s130
          %s133 = sshll.u32 %s125, 4
          %s134 = int_to_ptr.vmem [resolvable:$true] %s133
          %136 = dma.hbm_to_vmem [thread:$0]  %s131, 128, %s134, %s122
        $region24: #{tpu_custom_call.1} parent=19 // pred_fallthru
          _
      $region20: #{tpu_custom_call.1} parent=5 // pred_fallthru
        _
      %p137 = scmp.le.s32.totalorder 1, %s15
      %p138 = scmp.lt.s32.totalorder %s15, 3
      %p139 = pnand %p137, %p138
      %p140 = pneg %p139
      // Predicated region
      $region25: #{tpu_custom_call.1} parent=5 // pred_check
        _
      $region26: #{tpu_custom_call.1} parent=5 // pred_check_branch
        %142 = sbr.rel (%p139) target = $region28
      $region27: #{tpu_custom_call.1} parent=5 // pred_region
        %s143 = ssub.s32 %s15, 1
        // Predicated region
        $region29: #{tpu_custom_call.1} parent=27 // pred_check
          %p144 = pneg %p36
        $region30: #{tpu_custom_call.1} parent=27 // pred_check_branch
          %146 = sbr.rel (%p144) target = $region32
        $region31: #{tpu_custom_call.1} parent=27 // pred_region
          %147 = dma.done [#allocation6], 32
        $region32: #{tpu_custom_call.1} parent=27 // pred_fallthru
          _
        %s148 = sand.u32 %s49, 1
        %s149 = scalar_lea.sflag [#allocation4], %s148
        %s150 = sand.u32 %s49, 1
        %s151 = smul.addr %s150, 8
        %s152 = scalar_lea.vmem [#allocation7], %s151
        // Predicated region
        $region33: #{tpu_custom_call.1} parent=27 // pred_check
          %p153 = pneg %p62
        $region34: #{tpu_custom_call.1} parent=27 // pred_check_branch
          %155 = sbr.rel (%p153) target = $region36
        $region35: #{tpu_custom_call.1} parent=27 // pred_region
          %156 = dma.done %s149, 128
        $region36: #{tpu_custom_call.1} parent=27 // pred_fallthru
          _
        %157 = sfence
        %p158 = pneg %p36
        %p159 = pneg %p33
        %s160 = sand.u32 %s49, 1
        %s161 = scalar_lea.sflag [#allocation4], %s160
        %s162 = sand.u32 %s49, 1
        %s163 = smul.addr %s162, 8
        %s164 = scalar_lea.vmem [#allocation7], %s163
        %p165 = pneg %p62
        %p166 = pneg %p59
        %p167 = pneg %p88
        %p168 = pneg %p85
        %s169 = sand.u32 %s75, 1
        %s170 = scalar_lea.sflag [#allocation5], %s169
        %s171 = sand.u32 %s75, 1
        %s172 = smul.addr %s171, 8
        %s173 = scalar_lea.vmem [#allocation8], %s172
        %vm174 = vcmask 410624
        %175 = vst.msk [vmem:[#allocation2] sm:$0x3] %vm174, 0.0
        %vm176 = vcmask 828824
        %177 = vst.msk [vmem:[#allocation2 + $0x4] sm:$0x3] %vm176, 0.0
        %v178 = vlaneseq
        %v179 = vand.u32 %v178, 127
        %v180 = vadd.s32 %v179, 128
        %v181 = vand.u32 %v179, 15
        %v182 = vand.u32 %v180, 15
        %s183 = smul.u32 0, 2
        %s184 = smul.u32 0, 2
        %s185 = sadd.s32 %s183, %s184
        %s186 = smul.addr %s185, 4
        %s187 = scalar_lea.vmem %s152, %s186 [#allocation7]
        %v188 = vld [vmem:[%s187] sm:$0xff]
        %v190 = vcombine.high %v188, %v188
        %vm192 = vcmask 1043456
        %v193 = vsel %vm192, %v188, 0.0
        %v194 = vrot.slane %v193, 4
        %v195 = vadd.f32 %v193, %v194
        %v196 = vrot.slane %v195, 2
        %v197 = vadd.f32 %v195, %v196
        %v198 = vrot.slane %v197, 1
        %v199 = vadd.f32 %v197, %v198
        %v200 = vsel %vm192, %v190, 0.0
        %v201 = vrot.slane %v200, 4
        %v202 = vadd.f32 %v200, %v201
        %v203 = vrot.slane %v202, 2
        %v204 = vadd.f32 %v202, %v203
        %v205 = vrot.slane %v204, 1
        %v206 = vadd.f32 %v204, %v205
        %v207 = vadd.f32 %v199, 0.0
        %v208 = vadd.f32 %v206, 0.0
        %v209 = vsel %vm192, %v188, -inf
        %v210 = vrot.slane %v209, 4
        %v211 = vmax.f32 %v209, %v210
        %v212 = vrot.slane %v211, 2
        %v213 = vmax.f32 %v211, %v212
        %v214 = vrot.slane %v213, 1
        %v215 = vmax.f32 %v213, %v214
        %v216 = vsel %vm192, %v190, -inf
        %v217 = vrot.slane %v216, 4
        %v218 = vmax.f32 %v216, %v217
        %v219 = vrot.slane %v218, 2
        %v220 = vmax.f32 %v218, %v219
        %v221 = vrot.slane %v220, 1
        %v222 = vmax.f32 %v220, %v221
        %v223 = vmul.f32 %v207, 0.25
        %v224 = vmul.f32 %v208, 0.25
        %v227 = vcombine.low %v223, %v224
        %v229 = vunpack.c.l.s4 1966171168
        %v230 = vunpack.c.0.s8 %v229
        %v231 = vlaneseq
        %v232 = vshrl.u32 %v231, 7
        %v233 = vsub.s32 %v230, %v232
        %v234 = vrot.slane %v227, %v233
        %v236 = vunpack.c.l.s4 1966171168
        %v237 = vunpack.c.0.s8 %v236
        %v238 = vlaneseq
        %v239 = vshrl.u32 %v238, 7
        %v240 = vsub.s32 %v237, %v239
        %v241 = vrot.slane %v234, %v240
        %242 = vrot.lane.b32.xlu0 %v241, 51
        %v243 = vpop.permute.xlu0 %242
        %v244 = vrot.slane %v243, 7
        %vm245 = vcmask 416768
        %v246 = vsel %vm245, %v244, %v243
        %v248 = vlaneseq
        %vm249 = vcmp.ge.s32.totalorder %v248, 51
        %vm250 = vcmp.lt.s32.totalorder %v248, 307
        %vm251 = vmand %vm249, %vm250
        %252 = vst.msk [vmem:[#allocation2] ss:$2 sm:$0x7] %vm251, %v246
        %v255 = vcombine.low %v215, %v222
        %v257 = vunpack.c.l.s4 1966171168
        %v258 = vunpack.c.0.s8 %v257
        %v259 = vlaneseq
        %v260 = vshrl.u32 %v259, 7
        %v261 = vsub.s32 %v258, %v260
        %v262 = vrot.slane %v255, %v261
        %v264 = vunpack.c.l.s4 1966171168
        %v265 = vunpack.c.0.s8 %v264
        %v266 = vlaneseq
        %v267 = vshrl.u32 %v266, 7
        %v268 = vsub.s32 %v265, %v267
        %v269 = vrot.slane %v262, %v268
        %270 = vrot.lane.b32.xlu0 %v269, 51
        %v271 = vpop.permute.xlu0 %270
        %v272 = vrot.slane %v271, 7
        %v273 = vsel %vm245, %v272, %v271
        %s275 = scalar_lea.vmem [#allocation2], 1
        %276 = vst.msk [vmem:[%s275] ss:$2 sm:$0x7] %vm251, %v273
        %s277 = sld [smem:[#allocation3]]
        %v278 = vld [vmem:[#allocation2] ss:$2 sm:$0x3]
        %v279 = vstv %s277
        %v280 = vmul.f32 %v279, %v278
        %v281 = vadd.f32 %v280, 0.0
        %s282 = sld [smem:[#allocation3 + $0x7]]
        %v283 = vld [vmem:[#allocation2] ss:$2 sm:$0x7]
        %v284 = vstv %s282
        %v285 = vmul.f32 %v284, %v283
        %287 = vrot.lane.b32.xlu0 %v285, 112
        %v288 = vpop.permute.xlu0 %287
        %v289 = vrot.slane %v288, 1
        %vm290 = vcmask 916480
        %v291 = vsel %vm290, %v288, %v289
        %v293 = vadd.f32 %v281, %v291
        %s294 = sld [smem:[#allocation3 + $0xe]]
        %v295 = vstv %s294
        %v296 = vmul.f32 %v295, %v283
        %298 = vrot.lane.b32.xlu0 %v296, 96
        %v299 = vpop.permute.xlu0 %298
        %v300 = vrot.slane %v299, 1
        %vm301 = vcmask 785408
        %v302 = vsel %vm301, %v299, %v300
        %v304 = vadd.f32 %v293, %v302
        %s305 = sld [smem:[#allocation3 + $0x15]]
        %v306 = vstv %s305
        %v307 = vmul.f32 %v306, %v283
        %309 = vrot.lane.b32.xlu0 %v307, 80
        %v310 = vpop.permute.xlu0 %309
        %v311 = vrot.slane %v310, 1
        %vm312 = vcmask 654336
        %v313 = vsel %vm312, %v310, %v311
        %v315 = vadd.f32 %v304, %v313
        %s316 = sld [smem:[#allocation3 + $0x1c]]
        %v317 = vstv %s316
        %v318 = vmul.f32 %v317, %v283
        %320 = vrot.lane.b32.xlu0 %v318, 64
        %v321 = vpop.permute.xlu0 %320
        %v322 = vrot.slane %v321, 1
        %vm323 = vcmask 523264
        %v324 = vsel %vm323, %v321, %v322
        %v326 = vadd.f32 %v315, %v324
        %s327 = sld [smem:[#allocation3 + $0x23]]
        %v328 = vstv %s327
        %v329 = vmul.f32 %v328, %v283
        %331 = vrot.lane.b32.xlu0 %v329, 48
        %v332 = vpop.permute.xlu0 %331
        %v333 = vrot.slane %v332, 1
        %vm334 = vcmask 392192
        %v335 = vsel %vm334, %v332, %v333
        %v337 = vadd.f32 %v326, %v335
        %s338 = sld [smem:[#allocation3 + $0x2a]]
        %v339 = vstv %s338
        %v340 = vmul.f32 %v339, %v283
        %342 = vrot.lane.b32.xlu0 %v340, 32
        %v343 = vpop.permute.xlu0 %342
        %v344 = vrot.slane %v343, 1
        %vm345 = vcmask 261120
        %v346 = vsel %vm345, %v343, %v344
        %v348 = vadd.f32 %v337, %v346
        %s349 = sld [smem:[#allocation3 + $0x80]]
        %v350 = vld [vmem:[%s275] ss:$2 sm:$0x3]
        %v351 = vstv %s349
        %v352 = vmul.f32 %v351, %v350
        %v353 = vadd.f32 %v348, %v352
        %s354 = sld [smem:[#allocation3 + $0x87]]
        %v355 = vld [vmem:[%s275] ss:$2 sm:$0x7]
        %v356 = vstv %s354
        %v357 = vmul.f32 %v356, %v355
        %359 = vrot.lane.b32.xlu0 %v357, 112
        %v360 = vpop.permute.xlu0 %359
        %v361 = vrot.slane %v360, 1
        %v362 = vsel %vm290, %v360, %v361
        %v364 = vadd.f32 %v353, %v362
        %s365 = sld [smem:[#allocation3 + $0x8e]]
        %v366 = vstv %s365
        %v367 = vmul.f32 %v366, %v355
        %369 = vrot.lane.b32.xlu0 %v367, 96
        %v370 = vpop.permute.xlu0 %369
        %v371 = vrot.slane %v370, 1
        %v372 = vsel %vm301, %v370, %v371
        %v374 = vadd.f32 %v364, %v372
        %s375 = sld [smem:[#allocation3 + $0x95]]
        %v376 = vstv %s375
        %v377 = vmul.f32 %v376, %v355
        %379 = vrot.lane.b32.xlu0 %v377, 80
        %v380 = vpop.permute.xlu0 %379
        %v381 = vrot.slane %v380, 1
        %v382 = vsel %vm312, %v380, %v381
        %v384 = vadd.f32 %v374, %v382
        %s385 = sld [smem:[#allocation3 + $0x9c]]
        %v386 = vstv %s385
        %v387 = vmul.f32 %v386, %v355
        %389 = vrot.lane.b32.xlu0 %v387, 64
        %v390 = vpop.permute.xlu0 %389
        %v391 = vrot.slane %v390, 1
        %v392 = vsel %vm323, %v390, %v391
        %v394 = vadd.f32 %v384, %v392
        %s395 = sld [smem:[#allocation3 + $0xa3]]
        %v396 = vstv %s395
        %v397 = vmul.f32 %v396, %v355
        %399 = vrot.lane.b32.xlu0 %v397, 48
        %v400 = vpop.permute.xlu0 %399
        %v401 = vrot.slane %v400, 1
        %v402 = vsel %vm334, %v400, %v401
        %v404 = vadd.f32 %v394, %v402
        %s405 = sld [smem:[#allocation3 + $0xaa]]
        %v406 = vstv %s405
        %v407 = vmul.f32 %v406, %v355
        %409 = vrot.lane.b32.xlu0 %v407, 32
        %v410 = vpop.permute.xlu0 %409
        %v411 = vrot.slane %v410, 1
        %v412 = vsel %vm345, %v410, %v411
        %v414 = vadd.f32 %v404, %v412
        %vm415 = vcmp.ge.s32.totalorder %v181, 3
        %vm416 = vcmp.ge.s32.totalorder %v182, 3
        %vm417 = vcmp.le.s32.totalorder %v181, 18
        %vm418 = vcmp.le.s32.totalorder %v182, 18
        %vm419 = vmand %vm415, %vm417
        %vm420 = vmand %vm416, %vm418
        %v421 = vsel %vm419, 1.0, 0.0
        %v422 = vsel %vm420, 1.0, 0.0
        %v424 = vlaneseq
        %v425 = vshrl.u32 %v424, 7
        %v426 = vsub.s32 0, %v425
        %v427 = vrot.slane %v414, %v426
        %v428 = vlaneseq
        %v429 = vshrl.u32 %v428, 7
        %v430 = vsub.s32 1, %v429
        %v431 = vrot.slane %v414, %v430
        %v434 = vmul.f32 %v421, %v427
        %v435 = vmul.f32 %v422, %v431
        %v436 = vadd.f32 %v434, 0.0
        %v437 = vadd.f32 %v435, 0.0
        %s438 = sld [smem:[#allocation3 + $0x1]]
        %v439 = vstv %s438
        %v440 = vmul.f32 %v439, %v283
        %v441 = vadd.f32 %v440, 0.0
        %s442 = sld [smem:[#allocation3 + $0x8]]
        %v443 = vstv %s442
        %v444 = vmul.f32 %v443, %v283
        %446 = vrot.lane.b32.xlu0 %v444, 112
        %v447 = vpop.permute.xlu0 %446
        %v448 = vrot.slane %v447, 1
        %v449 = vsel %vm290, %v447, %v448
        %v451 = vadd.f32 %v441, %v449
        %s452 = sld [smem:[#allocation3 + $0xf]]
        %v453 = vstv %s452
        %v454 = vmul.f32 %v453, %v283
        %456 = vrot.lane.b32.xlu0 %v454, 96
        %v457 = vpop.permute.xlu0 %456
        %v458 = vrot.slane %v457, 1
        %v459 = vsel %vm301, %v457, %v458
        %v461 = vadd.f32 %v451, %v459
        %s462 = sld [smem:[#allocation3 + $0x16]]
        %v463 = vstv %s462
        %v464 = vmul.f32 %v463, %v283
        %466 = vrot.lane.b32.xlu0 %v464, 80
        %v467 = vpop.permute.xlu0 %466
        %v468 = vrot.slane %v467, 1
        %v469 = vsel %vm312, %v467, %v468
        %v471 = vadd.f32 %v461, %v469
        %s472 = sld [smem:[#allocation3 + $0x1d]]
        %v473 = vstv %s472
        %v474 = vmul.f32 %v473, %v283
        %476 = vrot.lane.b32.xlu0 %v474, 64
        %v477 = vpop.permute.xlu0 %476
        %v478 = vrot.slane %v477, 1
        %v479 = vsel %vm323, %v477, %v478
        %v481 = vadd.f32 %v471, %v479
        %s482 = sld [smem:[#allocation3 + $0x24]]
        %v483 = vstv %s482
        %v484 = vmul.f32 %v483, %v283
        %486 = vrot.lane.b32.xlu0 %v484, 48
        %v487 = vpop.permute.xlu0 %486
        %v488 = vrot.slane %v487, 1
        %v489 = vsel %vm334, %v487, %v488
        %v491 = vadd.f32 %v481, %v489
        %s492 = sld [smem:[#allocation3 + $0x2b]]
        %v493 = vstv %s492
        %v494 = vmul.f32 %v493, %v283
        %496 = vrot.lane.b32.xlu0 %v494, 32
        %v497 = vpop.permute.xlu0 %496
        %v498 = vrot.slane %v497, 1
        %v499 = vsel %vm345, %v497, %v498
        %v501 = vadd.f32 %v491, %v499
        %s502 = sld [smem:[#allocation3 + $0x81]]
        %v503 = vstv %s502
        %v504 = vmul.f32 %v503, %v355
        %v505 = vadd.f32 %v501, %v504
        %s506 = sld [smem:[#allocation3 + $0x88]]
        %v507 = vstv %s506
        %v508 = vmul.f32 %v507, %v355
        %510 = vrot.lane.b32.xlu0 %v508, 112
        %v511 = vpop.permute.xlu0 %510
        %v512 = vrot.slane %v511, 1
        %v513 = vsel %vm290, %v511, %v512
        %v515 = vadd.f32 %v505, %v513
        %s516 = sld [smem:[#allocation3 + $0x8f]]
        %v517 = vstv %s516
        %v518 = vmul.f32 %v517, %v355
        %520 = vrot.lane.b32.xlu0 %v518, 96
        %v521 = vpop.permute.xlu0 %520
        %v522 = vrot.slane %v521, 1
        %v523 = vsel %vm301, %v521, %v522
        %v525 = vadd.f32 %v515, %v523
        %s526 = sld [smem:[#allocation3 + $0x96]]
        %v527 = vstv %s526
        %v528 = vmul.f32 %v527, %v355
        %530 = vrot.lane.b32.xlu0 %v528, 80
        %v531 = vpop.permute.xlu0 %530
        %v532 = vrot.slane %v531, 1
        %v533 = vsel %vm312, %v531, %v532
        %v535 = vadd.f32 %v525, %v533
        %s536 = sld [smem:[#allocation3 + $0x9d]]
        %v537 = vstv %s536
        %v538 = vmul.f32 %v537, %v355
        %540 = vrot.lane.b32.xlu0 %v538, 64
        %v541 = vpop.permute.xlu0 %540
        %v542 = vrot.slane %v541, 1
        %v543 = vsel %vm323, %v541, %v542
        %v545 = vadd.f32 %v535, %v543
        %s546 = sld [smem:[#allocation3 + $0xa4]]
        %v547 = vstv %s546
        %v548 = vmul.f32 %v547, %v355
        %550 = vrot.lane.b32.xlu0 %v548, 48
        %v551 = vpop.permute.xlu0 %550
        %v552 = vrot.slane %v551, 1
        %v553 = vsel %vm334, %v551, %v552
        %v555 = vadd.f32 %v545, %v553
        %s556 = sld [smem:[#allocation3 + $0xab]]
        %v557 = vstv %s556
        %v558 = vmul.f32 %v557, %v355
        %560 = vrot.lane.b32.xlu0 %v558, 32
        %v561 = vpop.permute.xlu0 %560
        %v562 = vrot.slane %v561, 1
        %v563 = vsel %vm345, %v561, %v562
        %v565 = vadd.f32 %v555, %v563
        %vm566 = vcmp.ge.s32.totalorder %v181, 2
        %vm567 = vcmp.ge.s32.totalorder %v182, 2
        %vm568 = vcmp.le.s32.totalorder %v181, 17
        %vm569 = vcmp.le.s32.totalorder %v182, 17
        %vm570 = vmand %vm566, %vm568
        %vm571 = vmand %vm567, %vm569
        %v572 = vsel %vm570, 1.0, 0.0
        %v573 = vsel %vm571, 1.0, 0.0
        %v575 = vlaneseq
        %v576 = vshrl.u32 %v575, 7
        %v577 = vsub.s32 0, %v576
        %v578 = vrot.slane %v565, %v577
        %v579 = vlaneseq
        %v580 = vshrl.u32 %v579, 7
        %v581 = vsub.s32 1, %v580
        %v582 = vrot.slane %v565, %v581
        %v583 = vlaneseq
        %v584 = vshrl.u32 %v583, 7
        %v585 = vsub.s32 2, %v584
        %v586 = vrot.slane %v565, %v585
        %587 = vrot.lane.b32.xlu0 %v578, 127
        %v588 = vpop.permute.xlu0 %587
        %589 = vrot.lane.b32.xlu0 %v582, 127
        %v590 = vpop.permute.xlu0 %589
        %591 = vrot.lane.b32.xlu0 %v586, 127
        %v592 = vpop.permute.xlu0 %591
        %vm593 = vcmask 1039360
        %v594 = vsel %vm593, %v588, %v590
        %v595 = vsel %vm593, %v590, %v592
        %v598 = vmul.f32 %v572, %v594
        %v599 = vmul.f32 %v573, %v595
        %v600 = vadd.f32 %v436, %v598
        %v601 = vadd.f32 %v437, %v599
        %s602 = sld [smem:[#allocation3 + $0x2]]
        %v603 = vstv %s602
        %v604 = vmul.f32 %v603, %v283
        %v605 = vadd.f32 %v604, 0.0
        %s606 = sld [smem:[#allocation3 + $0x9]]
        %v607 = vstv %s606
        %v608 = vmul.f32 %v607, %v283
        %610 = vrot.lane.b32.xlu0 %v608, 112
        %v611 = vpop.permute.xlu0 %610
        %v612 = vrot.slane %v611, 1
        %v613 = vsel %vm290, %v611, %v612
        %v615 = vadd.f32 %v605, %v613
        %s616 = sld [smem:[#allocation3 + $0x10]]
        %v617 = vstv %s616
        %v618 = vmul.f32 %v617, %v283
        %620 = vrot.lane.b32.xlu0 %v618, 96
        %v621 = vpop.permute.xlu0 %620
        %v622 = vrot.slane %v621, 1
        %v623 = vsel %vm301, %v621, %v622
        %v625 = vadd.f32 %v615, %v623
        %s626 = sld [smem:[#allocation3 + $0x17]]
        %v627 = vstv %s626
        %v628 = vmul.f32 %v627, %v283
        %630 = vrot.lane.b32.xlu0 %v628, 80
        %v631 = vpop.permute.xlu0 %630
        %v632 = vrot.slane %v631, 1
        %v633 = vsel %vm312, %v631, %v632
        %v635 = vadd.f32 %v625, %v633
        %s636 = sld [smem:[#allocation3 + $0x1e]]
        %v637 = vstv %s636
        %v638 = vmul.f32 %v637, %v283
        %640 = vrot.lane.b32.xlu0 %v638, 64
        %v641 = vpop.permute.xlu0 %640
        %v642 = vrot.slane %v641, 1
        %v643 = vsel %vm323, %v641, %v642
        %v645 = vadd.f32 %v635, %v643
        %s646 = sld [smem:[#allocation3 + $0x25]]
        %v647 = vstv %s646
        %v648 = vmul.f32 %v647, %v283
        %650 = vrot.lane.b32.xlu0 %v648, 48
        %v651 = vpop.permute.xlu0 %650
        %v652 = vrot.slane %v651, 1
        %v653 = vsel %vm334, %v651, %v652
        %v655 = vadd.f32 %v645, %v653
        %s656 = sld [smem:[#allocation3 + $0x2c]]
        %v657 = vstv %s656
        %v658 = vmul.f32 %v657, %v283
        %660 = vrot.lane.b32.xlu0 %v658, 32
        %v661 = vpop.permute.xlu0 %660
        %v662 = vrot.slane %v661, 1
        %v663 = vsel %vm345, %v661, %v662
        %v665 = vadd.f32 %v655, %v663
        %s666 = sld [smem:[#allocation3 + $0x82]]
        %v667 = vstv %s666
        %v668 = vmul.f32 %v667, %v355
        %v669 = vadd.f32 %v665, %v668
        %s670 = sld [smem:[#allocation3 + $0x89]]
        %v671 = vstv %s670
        %v672 = vmul.f32 %v671, %v355
        %674 = vrot.lane.b32.xlu0 %v672, 112
        %v675 = vpop.permute.xlu0 %674
        %v676 = vrot.slane %v675, 1
        %v677 = vsel %vm290, %v675, %v676
        %v679 = vadd.f32 %v669, %v677
        %s680 = sld [smem:[#allocation3 + $0x90]]
        %v681 = vstv %s680
        %v682 = vmul.f32 %v681, %v355
        %684 = vrot.lane.b32.xlu0 %v682, 96
        %v685 = vpop.permute.xlu0 %684
        %v686 = vrot.slane %v685, 1
        %v687 = vsel %vm301, %v685, %v686
        %v689 = vadd.f32 %v679, %v687
        %s690 = sld [smem:[#allocation3 + $0x97]]
        %v691 = vstv %s690
        %v692 = vmul.f32 %v691, %v355
        %694 = vrot.lane.b32.xlu0 %v692, 80
        %v695 = vpop.permute.xlu0 %694
        %v696 = vrot.slane %v695, 1
        %v697 = vsel %vm312, %v695, %v696
        %v699 = vadd.f32 %v689, %v697
        %s700 = sld [smem:[#allocation3 + $0x9e]]
        %v701 = vstv %s700
        %v702 = vmul.f32 %v701, %v355
        %704 = vrot.lane.b32.xlu0 %v702, 64
        %v705 = vpop.permute.xlu0 %704
        %v706 = vrot.slane %v705, 1
        %v707 = vsel %vm323, %v705, %v706
        %v709 = vadd.f32 %v699, %v707
        %s710 = sld [smem:[#allocation3 + $0xa5]]
        %v711 = vstv %s710
        %v712 = vmul.f32 %v711, %v355
        %714 = vrot.lane.b32.xlu0 %v712, 48
        %v715 = vpop.permute.xlu0 %714
        %v716 = vrot.slane %v715, 1
        %v717 = vsel %vm334, %v715, %v716
        %v719 = vadd.f32 %v709, %v717
        %s720 = sld [smem:[#allocation3 + $0xac]]
        %v721 = vstv %s720
        %v722 = vmul.f32 %v721, %v355
        %724 = vrot.lane.b32.xlu0 %v722, 32
        %v725 = vpop.permute.xlu0 %724
        %v726 = vrot.slane %v725, 1
        %v727 = vsel %vm345, %v725, %v726
        %v729 = vadd.f32 %v719, %v727
        %vm730 = vcmp.ge.s32.totalorder %v181, 1
        %vm731 = vcmp.ge.s32.totalorder %v182, 1
        %vm732 = vcmp.le.s32.totalorder %v181, 16
        %vm733 = vcmp.le.s32.totalorder %v182, 16
        %vm734 = vmand %vm730, %vm732
        %vm735 = vmand %vm731, %vm733
        %v736 = vsel %vm734, 1.0, 0.0
        %v737 = vsel %vm735, 1.0, 0.0
        %v739 = vlaneseq
        %v740 = vshrl.u32 %v739, 7
        %v741 = vsub.s32 0, %v740
        %v742 = vrot.slane %v729, %v741
        %v743 = vlaneseq
        %v744 = vshrl.u32 %v743, 7
        %v745 = vsub.s32 1, %v744
        %v746 = vrot.slane %v729, %v745
        %v747 = vlaneseq
        %v748 = vshrl.u32 %v747, 7
        %v749 = vsub.s32 2, %v748
        %v750 = vrot.slane %v729, %v749
        %751 = vrot.lane.b32.xlu0 %v742, 126
        %v752 = vpop.permute.xlu0 %751
        %753 = vrot.lane.b32.xlu0 %v746, 126
        %v754 = vpop.permute.xlu0 %753
        %755 = vrot.lane.b32.xlu0 %v750, 126
        %v756 = vpop.permute.xlu0 %755
        %vm757 = vcmask 1031168
        %v758 = vsel %vm757, %v752, %v754
        %v759 = vsel %vm757, %v754, %v756
        %v762 = vmul.f32 %v736, %v758
        %v763 = vmul.f32 %v737, %v759
        %v764 = vadd.f32 %v600, %v762
        %v765 = vadd.f32 %v601, %v763
        %s766 = sld [smem:[#allocation3 + $0x3]]
        %v767 = vstv %s766
        %v768 = vmul.f32 %v767, %v283
        %v769 = vadd.f32 %v768, 0.0
        %s770 = sld [smem:[#allocation3 + $0xa]]
        %v771 = vstv %s770
        %v772 = vmul.f32 %v771, %v283
        %774 = vrot.lane.b32.xlu0 %v772, 112
        %v775 = vpop.permute.xlu0 %774
        %v776 = vrot.slane %v775, 1
        %v777 = vsel %vm290, %v775, %v776
        %v779 = vadd.f32 %v769, %v777
        %s780 = sld [smem:[#allocation3 + $0x11]]
        %v781 = vstv %s780
        %v782 = vmul.f32 %v781, %v283
        %784 = vrot.lane.b32.xlu0 %v782, 96
        %v785 = vpop.permute.xlu0 %784
        %v786 = vrot.slane %v785, 1
        %v787 = vsel %vm301, %v785, %v786
        %v789 = vadd.f32 %v779, %v787
        %s790 = sld [smem:[#allocation3 + $0x18]]
        %v791 = vstv %s790
        %v792 = vmul.f32 %v791, %v283
        %794 = vrot.lane.b32.xlu0 %v792, 80
        %v795 = vpop.permute.xlu0 %794
        %v796 = vrot.slane %v795, 1
        %v797 = vsel %vm312, %v795, %v796
        %v799 = vadd.f32 %v789, %v797
        %s800 = sld [smem:[#allocation3 + $0x1f]]
        %v801 = vstv %s800
        %v802 = vmul.f32 %v801, %v283
        %804 = vrot.lane.b32.xlu0 %v802, 64
        %v805 = vpop.permute.xlu0 %804
        %v806 = vrot.slane %v805, 1
        %v807 = vsel %vm323, %v805, %v806
        %v809 = vadd.f32 %v799, %v807
        %s810 = sld [smem:[#allocation3 + $0x26]]
        %v811 = vstv %s810
        %v812 = vmul.f32 %v811, %v283
        %814 = vrot.lane.b32.xlu0 %v812, 48
        %v815 = vpop.permute.xlu0 %814
        %v816 = vrot.slane %v815, 1
        %v817 = vsel %vm334, %v815, %v816
        %v819 = vadd.f32 %v809, %v817
        %s820 = sld [smem:[#allocation3 + $0x2d]]
        %v821 = vstv %s820
        %v822 = vmul.f32 %v821, %v283
        %824 = vrot.lane.b32.xlu0 %v822, 32
        %v825 = vpop.permute.xlu0 %824
        %v826 = vrot.slane %v825, 1
        %v827 = vsel %vm345, %v825, %v826
        %v829 = vadd.f32 %v819, %v827
        %s830 = sld [smem:[#allocation3 + $0x83]]
        %v831 = vstv %s830
        %v832 = vmul.f32 %v831, %v355
        %v833 = vadd.f32 %v829, %v832
        %s834 = sld [smem:[#allocation3 + $0x8a]]
        %v835 = vstv %s834
        %v836 = vmul.f32 %v835, %v355
        %838 = vrot.lane.b32.xlu0 %v836, 112
        %v839 = vpop.permute.xlu0 %838
        %v840 = vrot.slane %v839, 1
        %v841 = vsel %vm290, %v839, %v840
        %v843 = vadd.f32 %v833, %v841
        %s844 = sld [smem:[#allocation3 + $0x91]]
        %v845 = vstv %s844
        %v846 = vmul.f32 %v845, %v355
        %848 = vrot.lane.b32.xlu0 %v846, 96
        %v849 = vpop.permute.xlu0 %848
        %v850 = vrot.slane %v849, 1
        %v851 = vsel %vm301, %v849, %v850
        %v853 = vadd.f32 %v843, %v851
        %s854 = sld [smem:[#allocation3 + $0x98]]
        %v855 = vstv %s854
        %v856 = vmul.f32 %v855, %v355
        %858 = vrot.lane.b32.xlu0 %v856, 80
        %v859 = vpop.permute.xlu0 %858
        %v860 = vrot.slane %v859, 1
        %v861 = vsel %vm312, %v859, %v860
        %v863 = vadd.f32 %v853, %v861
        %s864 = sld [smem:[#allocation3 + $0x9f]]
        %v865 = vstv %s864
        %v866 = vmul.f32 %v865, %v355
        %868 = vrot.lane.b32.xlu0 %v866, 64
        %v869 = vpop.permute.xlu0 %868
        %v870 = vrot.slane %v869, 1
        %v871 = vsel %vm323, %v869, %v870
        %v873 = vadd.f32 %v863, %v871
        %s874 = sld [smem:[#allocation3 + $0xa6]]
        %v875 = vstv %s874
        %v876 = vmul.f32 %v875, %v355
        %878 = vrot.lane.b32.xlu0 %v876, 48
        %v879 = vpop.permute.xlu0 %878
        %v880 = vrot.slane %v879, 1
        %v881 = vsel %vm334, %v879, %v880
        %v883 = vadd.f32 %v873, %v881
        %s884 = sld [smem:[#allocation3 + $0xad]]
        %v885 = vstv %s884
        %v886 = vmul.f32 %v885, %v355
        %888 = vrot.lane.b32.xlu0 %v886, 32
        %v889 = vpop.permute.xlu0 %888
        %v890 = vrot.slane %v889, 1
        %v891 = vsel %vm345, %v889, %v890
        %v893 = vadd.f32 %v883, %v891
        %v895 = vlaneseq
        %v896 = vshrl.u32 %v895, 7
        %v897 = vsub.s32 0, %v896
        %v898 = vrot.slane %v893, %v897
        %v899 = vlaneseq
        %v900 = vshrl.u32 %v899, 7
        %v901 = vsub.s32 1, %v900
        %v902 = vrot.slane %v893, %v901
        %v903 = vlaneseq
        %v904 = vshrl.u32 %v903, 7
        %v905 = vsub.s32 2, %v904
        %v906 = vrot.slane %v893, %v905
        %907 = vrot.lane.b32.xlu0 %v898, 125
        %v908 = vpop.permute.xlu0 %907
        %909 = vrot.lane.b32.xlu0 %v902, 125
        %v910 = vpop.permute.xlu0 %909
        %911 = vrot.lane.b32.xlu0 %v906, 125
        %v912 = vpop.permute.xlu0 %911
        %vm913 = vcmask 1022976
        %v914 = vsel %vm913, %v908, %v910
        %v915 = vsel %vm913, %v910, %v912
        %v918 = vadd.f32 %v764, %v914
        %v919 = vadd.f32 %v765, %v915
        %s920 = sld [smem:[#allocation3 + $0x4]]
        %v921 = vstv %s920
        %v922 = vmul.f32 %v921, %v283
        %v923 = vadd.f32 %v922, 0.0
        %s924 = sld [smem:[#allocation3 + $0xb]]
        %v925 = vstv %s924
        %v926 = vmul.f32 %v925, %v283
        %928 = vrot.lane.b32.xlu0 %v926, 112
        %v929 = vpop.permute.xlu0 %928
        %v930 = vrot.slane %v929, 1
        %v931 = vsel %vm290, %v929, %v930
        %v933 = vadd.f32 %v923, %v931
        %s934 = sld [smem:[#allocation3 + $0x12]]
        %v935 = vstv %s934
        %v936 = vmul.f32 %v935, %v283
        %938 = vrot.lane.b32.xlu0 %v936, 96
        %v939 = vpop.permute.xlu0 %938
        %v940 = vrot.slane %v939, 1
        %v941 = vsel %vm301, %v939, %v940
        %v943 = vadd.f32 %v933, %v941
        %s944 = sld [smem:[#allocation3 + $0x19]]
        %v945 = vstv %s944
        %v946 = vmul.f32 %v945, %v283
        %948 = vrot.lane.b32.xlu0 %v946, 80
        %v949 = vpop.permute.xlu0 %948
        %v950 = vrot.slane %v949, 1
        %v951 = vsel %vm312, %v949, %v950
        %v953 = vadd.f32 %v943, %v951
        %s954 = sld [smem:[#allocation3 + $0x20]]
        %v955 = vstv %s954
        %v956 = vmul.f32 %v955, %v283
        %958 = vrot.lane.b32.xlu0 %v956, 64
        %v959 = vpop.permute.xlu0 %958
        %v960 = vrot.slane %v959, 1
        %v961 = vsel %vm323, %v959, %v960
        %v963 = vadd.f32 %v953, %v961
        %s964 = sld [smem:[#allocation3 + $0x27]]
        %v965 = vstv %s964
        %v966 = vmul.f32 %v965, %v283
        %968 = vrot.lane.b32.xlu0 %v966, 48
        %v969 = vpop.permute.xlu0 %968
        %v970 = vrot.slane %v969, 1
        %v971 = vsel %vm334, %v969, %v970
        %v973 = vadd.f32 %v963, %v971
        %s974 = sld [smem:[#allocation3 + $0x2e]]
        %v975 = vstv %s974
        %v976 = vmul.f32 %v975, %v283
        %978 = vrot.lane.b32.xlu0 %v976, 32
        %v979 = vpop.permute.xlu0 %978
        %v980 = vrot.slane %v979, 1
        %v981 = vsel %vm345, %v979, %v980
        %v983 = vadd.f32 %v973, %v981
        %s984 = sld [smem:[#allocation3 + $0x84]]
        %v985 = vstv %s984
        %v986 = vmul.f32 %v985, %v355
        %v987 = vadd.f32 %v983, %v986
        %s988 = sld [smem:[#allocation3 + $0x8b]]
        %v989 = vstv %s988
        %v990 = vmul.f32 %v989, %v355
        %992 = vrot.lane.b32.xlu0 %v990, 112
        %v993 = vpop.permute.xlu0 %992
        %v994 = vrot.slane %v993, 1
        %v995 = vsel %vm290, %v993, %v994
        %v997 = vadd.f32 %v987, %v995
        %s998 = sld [smem:[#allocation3 + $0x92]]
        %v999 = vstv %s998
        %v1000 = vmul.f32 %v999, %v355
        %1002 = vrot.lane.b32.xlu0 %v1000, 96
        %v1003 = vpop.permute.xlu0 %1002
        %v1004 = vrot.slane %v1003, 1
        %v1005 = vsel %vm301, %v1003, %v1004
        %v1007 = vadd.f32 %v997, %v1005
        %s1008 = sld [smem:[#allocation3 + $0x99]]
        %v1009 = vstv %s1008
        %v1010 = vmul.f32 %v1009, %v355
        %1012 = vrot.lane.b32.xlu0 %v1010, 80
        %v1013 = vpop.permute.xlu0 %1012
        %v1014 = vrot.slane %v1013, 1
        %v1015 = vsel %vm312, %v1013, %v1014
        %v1017 = vadd.f32 %v1007, %v1015
        %s1018 = sld [smem:[#allocation3 + $0xa0]]
        %v1019 = vstv %s1018
        %v1020 = vmul.f32 %v1019, %v355
        %1022 = vrot.lane.b32.xlu0 %v1020, 64
        %v1023 = vpop.permute.xlu0 %1022
        %v1024 = vrot.slane %v1023, 1
        %v1025 = vsel %vm323, %v1023, %v1024
        %v1027 = vadd.f32 %v1017, %v1025
        %s1028 = sld [smem:[#allocation3 + $0xa7]]
        %v1029 = vstv %s1028
        %v1030 = vmul.f32 %v1029, %v355
        %1032 = vrot.lane.b32.xlu0 %v1030, 48
        %v1033 = vpop.permute.xlu0 %1032
        %v1034 = vrot.slane %v1033, 1
        %v1035 = vsel %vm334, %v1033, %v1034
        %v1037 = vadd.f32 %v1027, %v1035
        %s1038 = sld [smem:[#allocation3 + $0xae]]
        %v1039 = vstv %s1038
        %v1040 = vmul.f32 %v1039, %v355
        %1042 = vrot.lane.b32.xlu0 %v1040, 32
        %v1043 = vpop.permute.xlu0 %1042
        %v1044 = vrot.slane %v1043, 1
        %v1045 = vsel %vm345, %v1043, %v1044
        %v1047 = vadd.f32 %v1037, %v1045
        %vm1048 = vcmp.ge.s32.totalorder %v181, 4294967295
        %vm1049 = vcmp.ge.s32.totalorder %v182, 4294967295
        %vm1050 = vcmp.le.s32.totalorder %v181, 14
        %vm1051 = vcmp.le.s32.totalorder %v182, 14
        %vm1052 = vmand %vm1048, %vm1050
        %vm1053 = vmand %vm1049, %vm1051
        %v1054 = vsel %vm1052, 1.0, 0.0
        %v1055 = vsel %vm1053, 1.0, 0.0
        %v1057 = vlaneseq
        %v1058 = vshrl.u32 %v1057, 7
        %v1059 = vsub.s32 0, %v1058
        %v1060 = vrot.slane %v1047, %v1059
        %v1061 = vlaneseq
        %v1062 = vshrl.u32 %v1061, 7
        %v1063 = vsub.s32 1, %v1062
        %v1064 = vrot.slane %v1047, %v1063
        %v1065 = vlaneseq
        %v1066 = vshrl.u32 %v1065, 7
        %v1067 = vsub.s32 2, %v1066
        %v1068 = vrot.slane %v1047, %v1067
        %1069 = vrot.lane.b32.xlu0 %v1060, 124
        %v1070 = vpop.permute.xlu0 %1069
        %1071 = vrot.lane.b32.xlu0 %v1064, 124
        %v1072 = vpop.permute.xlu0 %1071
        %1073 = vrot.lane.b32.xlu0 %v1068, 124
        %v1074 = vpop.permute.xlu0 %1073
        %vm1075 = vcmask 1014784
        %v1076 = vsel %vm1075, %v1070, %v1072
        %v1077 = vsel %vm1075, %v1072, %v1074
        %v1080 = vmul.f32 %v1054, %v1076
        %v1081 = vmul.f32 %v1055, %v1077
        %v1082 = vadd.f32 %v918, %v1080
        %v1083 = vadd.f32 %v919, %v1081
        %s1084 = sld [smem:[#allocation3 + $0x5]]
        %v1085 = vstv %s1084
        %v1086 = vmul.f32 %v1085, %v283
        %v1087 = vadd.f32 %v1086, 0.0
        %s1088 = sld [smem:[#allocation3 + $0xc]]
        %v1089 = vstv %s1088
        %v1090 = vmul.f32 %v1089, %v283
        %1092 = vrot.lane.b32.xlu0 %v1090, 112
        %v1093 = vpop.permute.xlu0 %1092
        %v1094 = vrot.slane %v1093, 1
        %v1095 = vsel %vm290, %v1093, %v1094
        %v1097 = vadd.f32 %v1087, %v1095
        %s1098 = sld [smem:[#allocation3 + $0x13]]
        %v1099 = vstv %s1098
        %v1100 = vmul.f32 %v1099, %v283
        %1102 = vrot.lane.b32.xlu0 %v1100, 96
        %v1103 = vpop.permute.xlu0 %1102
        %v1104 = vrot.slane %v1103, 1
        %v1105 = vsel %vm301, %v1103, %v1104
        %v1107 = vadd.f32 %v1097, %v1105
        %s1108 = sld [smem:[#allocation3 + $0x1a]]
        %v1109 = vstv %s1108
        %v1110 = vmul.f32 %v1109, %v283
        %1112 = vrot.lane.b32.xlu0 %v1110, 80
        %v1113 = vpop.permute.xlu0 %1112
        %v1114 = vrot.slane %v1113, 1
        %v1115 = vsel %vm312, %v1113, %v1114
        %v1117 = vadd.f32 %v1107, %v1115
        %s1118 = sld [smem:[#allocation3 + $0x21]]
        %v1119 = vstv %s1118
        %v1120 = vmul.f32 %v1119, %v283
        %1122 = vrot.lane.b32.xlu0 %v1120, 64
        %v1123 = vpop.permute.xlu0 %1122
        %v1124 = vrot.slane %v1123, 1
        %v1125 = vsel %vm323, %v1123, %v1124
        %v1127 = vadd.f32 %v1117, %v1125
        %s1128 = sld [smem:[#allocation3 + $0x28]]
        %v1129 = vstv %s1128
        %v1130 = vmul.f32 %v1129, %v283
        %1132 = vrot.lane.b32.xlu0 %v1130, 48
        %v1133 = vpop.permute.xlu0 %1132
        %v1134 = vrot.slane %v1133, 1
        %v1135 = vsel %vm334, %v1133, %v1134
        %v1137 = vadd.f32 %v1127, %v1135
        %s1138 = sld [smem:[#allocation3 + $0x2f]]
        %v1139 = vstv %s1138
        %v1140 = vmul.f32 %v1139, %v283
        %1142 = vrot.lane.b32.xlu0 %v1140, 32
        %v1143 = vpop.permute.xlu0 %1142
        %v1144 = vrot.slane %v1143, 1
        %v1145 = vsel %vm345, %v1143, %v1144
        %v1147 = vadd.f32 %v1137, %v1145
        %s1148 = sld [smem:[#allocation3 + $0x85]]
        %v1149 = vstv %s1148
        %v1150 = vmul.f32 %v1149, %v355
        %v1151 = vadd.f32 %v1147, %v1150
        %s1152 = sld [smem:[#allocation3 + $0x8c]]
        %v1153 = vstv %s1152
        %v1154 = vmul.f32 %v1153, %v355
        %1156 = vrot.lane.b32.xlu0 %v1154, 112
        %v1157 = vpop.permute.xlu0 %1156
        %v1158 = vrot.slane %v1157, 1
        %v1159 = vsel %vm290, %v1157, %v1158
        %v1161 = vadd.f32 %v1151, %v1159
        %s1162 = sld [smem:[#allocation3 + $0x93]]
        %v1163 = vstv %s1162
        %v1164 = vmul.f32 %v1163, %v355
        %1166 = vrot.lane.b32.xlu0 %v1164, 96
        %v1167 = vpop.permute.xlu0 %1166
        %v1168 = vrot.slane %v1167, 1
        %v1169 = vsel %vm301, %v1167, %v1168
        %v1171 = vadd.f32 %v1161, %v1169
        %s1172 = sld [smem:[#allocation3 + $0x9a]]
        %v1173 = vstv %s1172
        %v1174 = vmul.f32 %v1173, %v355
        %1176 = vrot.lane.b32.xlu0 %v1174, 80
        %v1177 = vpop.permute.xlu0 %1176
        %v1178 = vrot.slane %v1177, 1
        %v1179 = vsel %vm312, %v1177, %v1178
        %v1181 = vadd.f32 %v1171, %v1179
        %s1182 = sld [smem:[#allocation3 + $0xa1]]
        %v1183 = vstv %s1182
        %v1184 = vmul.f32 %v1183, %v355
        %1186 = vrot.lane.b32.xlu0 %v1184, 64
        %v1187 = vpop.permute.xlu0 %1186
        %v1188 = vrot.slane %v1187, 1
        %v1189 = vsel %vm323, %v1187, %v1188
        %v1191 = vadd.f32 %v1181, %v1189
        %s1192 = sld [smem:[#allocation3 + $0xa8]]
        %v1193 = vstv %s1192
        %v1194 = vmul.f32 %v1193, %v355
        %1196 = vrot.lane.b32.xlu0 %v1194, 48
        %v1197 = vpop.permute.xlu0 %1196
        %v1198 = vrot.slane %v1197, 1
        %v1199 = vsel %vm334, %v1197, %v1198
        %v1201 = vadd.f32 %v1191, %v1199
        %s1202 = sld [smem:[#allocation3 + $0xaf]]
        %v1203 = vstv %s1202
        %v1204 = vmul.f32 %v1203, %v355
        %1206 = vrot.lane.b32.xlu0 %v1204, 32
        %v1207 = vpop.permute.xlu0 %1206
        %v1208 = vrot.slane %v1207, 1
        %v1209 = vsel %vm345, %v1207, %v1208
        %v1211 = vadd.f32 %v1201, %v1209
        %vm1212 = vcmp.ge.s32.totalorder %v181, 4294967294
        %vm1213 = vcmp.ge.s32.totalorder %v182, 4294967294
        %vm1214 = vcmp.le.s32.totalorder %v181, 13
        %vm1215 = vcmp.le.s32.totalorder %v182, 13
        %vm1216 = vmand %vm1212, %vm1214
        %vm1217 = vmand %vm1213, %vm1215
        %v1218 = vsel %vm1216, 1.0, 0.0
        %v1219 = vsel %vm1217, 1.0, 0.0
        %v1221 = vlaneseq
        %v1222 = vshrl.u32 %v1221, 7
        %v1223 = vsub.s32 0, %v1222
        %v1224 = vrot.slane %v1211, %v1223
        %v1225 = vlaneseq
        %v1226 = vshrl.u32 %v1225, 7
        %v1227 = vsub.s32 1, %v1226
        %v1228 = vrot.slane %v1211, %v1227
        %v1229 = vlaneseq
        %v1230 = vshrl.u32 %v1229, 7
        %v1231 = vsub.s32 2, %v1230
        %v1232 = vrot.slane %v1211, %v1231
        %1233 = vrot.lane.b32.xlu0 %v1224, 123
        %v1234 = vpop.permute.xlu0 %1233
        %1235 = vrot.lane.b32.xlu0 %v1228, 123
        %v1236 = vpop.permute.xlu0 %1235
        %1237 = vrot.lane.b32.xlu0 %v1232, 123
        %v1238 = vpop.permute.xlu0 %1237
        %vm1239 = vcmask 1006592
        %v1240 = vsel %vm1239, %v1234, %v1236
        %v1241 = vsel %vm1239, %v1236, %v1238
        %v1244 = vmul.f32 %v1218, %v1240
        %v1245 = vmul.f32 %v1219, %v1241
        %v1246 = vadd.f32 %v1082, %v1244
        %v1247 = vadd.f32 %v1083, %v1245
        %s1248 = sld [smem:[#allocation3 + $0x6]]
        %v1249 = vstv %s1248
        %v1250 = vmul.f32 %v1249, %v283
        %v1251 = vadd.f32 %v1250, 0.0
        %s1252 = sld [smem:[#allocation3 + $0xd]]
        %v1253 = vstv %s1252
        %v1254 = vmul.f32 %v1253, %v283
        %1256 = vrot.lane.b32.xlu0 %v1254, 112
        %v1257 = vpop.permute.xlu0 %1256
        %v1258 = vrot.slane %v1257, 1
        %v1259 = vsel %vm290, %v1257, %v1258
        %v1261 = vadd.f32 %v1251, %v1259
        %s1262 = sld [smem:[#allocation3 + $0x14]]
        %v1263 = vstv %s1262
        %v1264 = vmul.f32 %v1263, %v283
        %1266 = vrot.lane.b32.xlu0 %v1264, 96
        %v1267 = vpop.permute.xlu0 %1266
        %v1268 = vrot.slane %v1267, 1
        %v1269 = vsel %vm301, %v1267, %v1268
        %v1271 = vadd.f32 %v1261, %v1269
        %s1272 = sld [smem:[#allocation3 + $0x1b]]
        %v1273 = vstv %s1272
        %v1274 = vmul.f32 %v1273, %v283
        %1276 = vrot.lane.b32.xlu0 %v1274, 80
        %v1277 = vpop.permute.xlu0 %1276
        %v1278 = vrot.slane %v1277, 1
        %v1279 = vsel %vm312, %v1277, %v1278
        %v1281 = vadd.f32 %v1271, %v1279
        %s1282 = sld [smem:[#allocation3 + $0x22]]
        %v1283 = vstv %s1282
        %v1284 = vmul.f32 %v1283, %v283
        %1286 = vrot.lane.b32.xlu0 %v1284, 64
        %v1287 = vpop.permute.xlu0 %1286
        %v1288 = vrot.slane %v1287, 1
        %v1289 = vsel %vm323, %v1287, %v1288
        %v1291 = vadd.f32 %v1281, %v1289
        %s1292 = sld [smem:[#allocation3 + $0x29]]
        %v1293 = vstv %s1292
        %v1294 = vmul.f32 %v1293, %v283
        %1296 = vrot.lane.b32.xlu0 %v1294, 48
        %v1297 = vpop.permute.xlu0 %1296
        %v1298 = vrot.slane %v1297, 1
        %v1299 = vsel %vm334, %v1297, %v1298
        %v1301 = vadd.f32 %v1291, %v1299
        %s1302 = sld [smem:[#allocation3 + $0x30]]
        %v1303 = vstv %s1302
        %v1304 = vmul.f32 %v1303, %v283
        %1306 = vrot.lane.b32.xlu0 %v1304, 32
        %v1307 = vpop.permute.xlu0 %1306
        %v1308 = vrot.slane %v1307, 1
        %v1309 = vsel %vm345, %v1307, %v1308
        %v1311 = vadd.f32 %v1301, %v1309
        %s1312 = sld [smem:[#allocation3 + $0x86]]
        %v1313 = vstv %s1312
        %v1314 = vmul.f32 %v1313, %v355
        %v1315 = vadd.f32 %v1311, %v1314
        %s1316 = sld [smem:[#allocation3 + $0x8d]]
        %v1317 = vstv %s1316
        %v1318 = vmul.f32 %v1317, %v355
        %1320 = vrot.lane.b32.xlu0 %v1318, 112
        %v1321 = vpop.permute.xlu0 %1320
        %v1322 = vrot.slane %v1321, 1
        %v1323 = vsel %vm290, %v1321, %v1322
        %v1325 = vadd.f32 %v1315, %v1323
        %s1326 = sld [smem:[#allocation3 + $0x94]]
        %v1327 = vstv %s1326
        %v1328 = vmul.f32 %v1327, %v355
        %1330 = vrot.lane.b32.xlu0 %v1328, 96
        %v1331 = vpop.permute.xlu0 %1330
        %v1332 = vrot.slane %v1331, 1
        %v1333 = vsel %vm301, %v1331, %v1332
        %v1335 = vadd.f32 %v1325, %v1333
        %s1336 = sld [smem:[#allocation3 + $0x9b]]
        %v1337 = vstv %s1336
        %v1338 = vmul.f32 %v1337, %v355
        %1340 = vrot.lane.b32.xlu0 %v1338, 80
        %v1341 = vpop.permute.xlu0 %1340
        %v1342 = vrot.slane %v1341, 1
        %v1343 = vsel %vm312, %v1341, %v1342
        %v1345 = vadd.f32 %v1335, %v1343
        %s1346 = sld [smem:[#allocation3 + $0xa2]]
        %v1347 = vstv %s1346
        %v1348 = vmul.f32 %v1347, %v355
        %1350 = vrot.lane.b32.xlu0 %v1348, 64
        %v1351 = vpop.permute.xlu0 %1350
        %v1352 = vrot.slane %v1351, 1
        %v1353 = vsel %vm323, %v1351, %v1352
        %v1355 = vadd.f32 %v1345, %v1353
        %s1356 = sld [smem:[#allocation3 + $0xa9]]
        %v1357 = vstv %s1356
        %v1358 = vmul.f32 %v1357, %v355
        %1360 = vrot.lane.b32.xlu0 %v1358, 48
        %v1361 = vpop.permute.xlu0 %1360
        %v1362 = vrot.slane %v1361, 1
        %v1363 = vsel %vm334, %v1361, %v1362
        %v1365 = vadd.f32 %v1355, %v1363
        %s1366 = sld [smem:[#allocation3 + $0xb0]]
        %v1367 = vstv %s1366
        %v1368 = vmul.f32 %v1367, %v355
        %1370 = vrot.lane.b32.xlu0 %v1368, 32
        %v1371 = vpop.permute.xlu0 %1370
        %v1372 = vrot.slane %v1371, 1
        %v1373 = vsel %vm345, %v1371, %v1372
        %v1375 = vadd.f32 %v1365, %v1373
        %vm1376 = vcmp.ge.s32.totalorder %v181, 4294967293
        %vm1377 = vcmp.ge.s32.totalorder %v182, 4294967293
        %vm1378 = vcmp.le.s32.totalorder %v181, 12
        %vm1379 = vcmp.le.s32.totalorder %v182, 12
        %vm1380 = vmand %vm1376, %vm1378
        %vm1381 = vmand %vm1377, %vm1379
        %v1382 = vsel %vm1380, 1.0, 0.0
        %v1383 = vsel %vm1381, 1.0, 0.0
        %v1385 = vlaneseq
        %v1386 = vshrl.u32 %v1385, 7
        %v1387 = vsub.s32 0, %v1386
        %v1388 = vrot.slane %v1375, %v1387
        %v1389 = vlaneseq
        %v1390 = vshrl.u32 %v1389, 7
        %v1391 = vsub.s32 1, %v1390
        %v1392 = vrot.slane %v1375, %v1391
        %v1393 = vlaneseq
        %v1394 = vshrl.u32 %v1393, 7
        %v1395 = vsub.s32 2, %v1394
        %v1396 = vrot.slane %v1375, %v1395
        %1397 = vrot.lane.b32.xlu0 %v1388, 122
        %v1398 = vpop.permute.xlu0 %1397
        %1399 = vrot.lane.b32.xlu0 %v1392, 122
        %v1400 = vpop.permute.xlu0 %1399
        %1401 = vrot.lane.b32.xlu0 %v1396, 122
        %v1402 = vpop.permute.xlu0 %1401
        %vm1403 = vcmask 998400
        %v1404 = vsel %vm1403, %v1398, %v1400
        %v1405 = vsel %vm1403, %v1400, %v1402
        %v1408 = vmul.f32 %v1382, %v1404
        %v1409 = vmul.f32 %v1383, %v1405
        %v1410 = vadd.f32 %v1246, %v1408
        %v1411 = vadd.f32 %v1247, %v1409
        %v1412 = vxor.u32 %v1410, 2147483648
        %v1413 = vxor.u32 %v1411, 2147483648
        %v1414 = vmul.f32 %v1412, 1.442695
        %v1415 = vpow.pop %v1414
        %v1416 = vmul.f32 %v1413, 1.442695
        %v1417 = vpow.pop %v1416
        %v1418 = vadd.f32 %v1415, 1.0
        %v1419 = vadd.f32 %v1417, 1.0
        %v1420 = vrcp.pop %v1418
        %v1421 = vmul.f32 1.0, %v1420
        %v1422 = vrcp.pop %v1419
        %v1423 = vmul.f32 1.0, %v1422
        %v1424 = vlaneseq
        %v1425 = vshrl.u32 %v1424, 7
        %v1426 = vsub.s32 0, %v1425
        %v1427 = vrot.slane %v1421, %v1426
        %v1428 = vlaneseq
        %v1429 = vshrl.u32 %v1428, 7
        %v1430 = vsub.s32 0, %v1429
        %v1431 = vrot.slane %v1423, %v1430
        %v1432 = vld [vmem:[%s187] sm:$0xff]
        %v1435 = vcombine.low %v1427, %v1431
        %v1437 = vmul.f32 %v1432, %v1435
        %s1438 = smul.addr %s185, 4
        %s1439 = scalar_lea.vmem %s173, %s1438 [#allocation8]
        %1440 = vst [vmem:[%s1439] sm:$0xff] %v1437
        %s1441 = sand.u32 %s75, 1
        %s1442 = scalar_lea.sflag [#allocation5], %s1441
        %s1443 = sand.u32 %s75, 1
        %s1444 = smul.addr %s1443, 8
        %s1445 = scalar_lea.vmem [#allocation8], %s1444
        // Predicated region
        $region37: #{tpu_custom_call.1} parent=27 // pred_check
          %p1446 = pneg %p85
        $region38: #{tpu_custom_call.1} parent=27 // pred_check_branch
          %1448 = sbr.rel (%p1446) target = $region40
        $region39: #{tpu_custom_call.1} parent=27 // pred_region
          %s1450 = ssub.s32 128, 128
          %1451 = vsyncadd %s1442, %s1450
          %s1452 = smul.addr %s20, 2
          %s1453 = smul.addr %s1452, 64
          %s1454 = scalar_lea.hbm %s2, %s1453
          %s1456 = sshll.u32 %s1445, 4
          %s1457 = int_to_ptr.vmem [resolvable:$true] %s1456
          %1459 = dma.vmem_to_hbm [thread:$0]  %s1457, 128, %s1454, %s1442
        $region40: #{tpu_custom_call.1} parent=27 // pred_fallthru
          _
      $region28: #{tpu_custom_call.1} parent=5 // pred_fallthru
        _
      %p1460 = scmp.le.s32.totalorder 2, %s15
      // Predicated region
      $region41: #{tpu_custom_call.1} parent=5 // pred_check
        %p1461 = pneg %p1460
      $region42: #{tpu_custom_call.1} parent=5 // pred_check_branch
        %1463 = sbr.rel (%p1461) target = $region44
      $region43: #{tpu_custom_call.1} parent=5 // pred_region
        %s1464 = ssub.s32 %s15, 2
        // Predicated region
        $region45: #{tpu_custom_call.1} parent=43 // pred_check
          %p1465 = pneg %p91
        $region46: #{tpu_custom_call.1} parent=43 // pred_check_branch
          %1467 = sbr.rel (%p1465) target = $region48
        $region47: #{tpu_custom_call.1} parent=43 // pred_region
          %s1468 = sand.u32 %s76, 1
          %s1469 = scalar_lea.sflag [#allocation5], %s1468
          %s1470 = sand.u32 %s76, 1
          %s1471 = smul.addr %s1470, 8
          %s1472 = scalar_lea.vmem [#allocation8], %s1471
          %1473 = dma.done %s1469, 128
        $region48: #{tpu_custom_call.1} parent=43 // pred_fallthru
          _
      $region44: #{tpu_custom_call.1} parent=5 // pred_fallthru
        _
    $region6: #{tpu_custom_call.1} parent=1 // loop_footer
      %s19 = sadd.s32 1, %s15
    $region7: #{tpu_custom_call.1} parent=1 // loop_footer_branch
      %14 = sbr.rel target = $region3
    $region8: #{tpu_custom_call.1} parent=1 // loop_exit
      _
    %1474 = vsyncpa [#allocation4], 1
    %s1475 = scalar_lea.sflag [#allocation4], 1
    %1476 = vsyncpa %s1475, 1
    %1477 = vsyncpa [#allocation5], 1
    %s1478 = scalar_lea.sflag [#allocation5], 1
    %1479 = vsyncpa %s1478, 1
    %1480 = vsyncpa [#allocation6], 1
    %s1481 = scalar_lea.sflag [#allocation6], 1
    %1482 = vsyncpa %s1481, 1

</llo_original>
